<compile_context>
chip_gen: v7x
topology: tpu7x:2x2x1
jax: 0.10.0
libtpu: 0.0.40
codegen_flags: <defaults>
</compile_context>

<pallas_src>
import functools

import numpy as np
import jax
import jax.numpy as jnp
from jax import lax
from jax.experimental import pallas as pl
from jax.experimental.pallas import tpu as pltpu


def _spatial_attn_kernel(w_ref, emb_ref, out_ref, *, ksize, padded_w):
    """One block of batch elements.

    w_ref   : SMEM (2*k*k,) f32   conv weight, [channel(avg,max), ky, kx] order
    emb_ref : VMEM (B, S, C, P)   spatially pre-padded aligned embeddings,
                                  P = (H+2p)*(W+2p) flattened (lane-dense)
    out_ref : VMEM (B, C, P)      padded output (halo positions are zero)
    """
    B, S, C, P = emb_ref.shape
    k = ksize
    p = k // 2

    # ---- channel mean / max per frame (sublane reductions over C) ----
    avg = []
    mx = []
    for s in range(S):
        es = emb_ref[:, s]                         # (B, C, P)
        avg.append(jnp.mean(es, axis=1))           # (B, P)
        mx.append(jnp.max(es, axis=1))             # (B, P)

    # ---- 3x3 conv (2-in / 1-out); zero padding is baked into the halo ----
    # Shift-and-accumulate: the spatial shifts become lane rotations (XLU).
    # For every interior output position the shifted read stays in-bounds, so
    # the rotation wrap-around only touches halo outputs (which are unused).
    att = []
    for s in range(S):
        a = jnp.zeros((B, P), jnp.float32)
        for ky in range(k):
            for kx in range(k):
                d = (ky - p) * padded_w + (kx - p)
                wa = w_ref[ky * k + kx]              # avg-channel weight
                wm = w_ref[k * k + ky * k + kx]      # max-channel weight
                if d == 0:
                    a = a + wa * avg[s] + wm * mx[s]
                else:
                    sh = (-d) % P                    # result[g] = src[g + d]
                    a = (a + wa * pltpu.roll(avg[s], shift=sh, axis=1)
                           + wm * pltpu.roll(mx[s], shift=sh, axis=1))
        att.append(a)

    # ---- softmax over the sequence (per spatial position) ----
    m = att[0]
    for s in range(1, S):
        m = jnp.maximum(m, att[s])
    e = [jnp.exp(att[s] - m) for s in range(S)]
    den = e[0]
    for s in range(1, S):
        den = den + e[s]
    inv = pl.reciprocal(den, approx=True)            # EUP slot
    inv = inv * (2.0 - den * inv)                    # one Newton step -> ~f32
    wgt = [e[s] * inv for s in range(S)]             # (B, P) each

    # ---- weighted sum over the sequence, streamed per batch element ----
    for b in range(B):
        acc = emb_ref[b, 0] * wgt[0][b:b + 1]        # (C, P)
        for s in range(1, S):
            acc = acc + emb_ref[b, s] * wgt[s][b:b + 1]
        out_ref[b] = acc


def aligned_embedding(embeddings, cropsize_list, default_sz=7, extra_pad=0):
    """Bilinear upsample (align_corners=False) + zero pad, NCHW throughout.

    embeddings: (N, S, C, sz, sz) -> (N, S, C, max_sz + 2e, max_sz + 2e), max_sz
    `extra_pad` adds a zero halo used as the conv's SAME padding by the kernel.
    """
    min_crop = min(cropsize_list)
    interp_sz = [int(np.ceil(c * default_sz / min_crop)) for c in cropsize_list]
    max_sz = max(interp_sz)
    N, S, C, sz, _ = embeddings.shape
    outs = []
    for i in range(S):
        emb = embeddings[:, i]                                   # (N, C, sz, sz)
        s = interp_sz[i]
        # Pure upsampling (scale >= 1), so antialiasing is inactive and this
        # matches PyTorch F.interpolate(mode='bilinear', align_corners=False).
        # TODO(synk): numerics vs PyTorch F.interpolate are not cross-checked
        # in-script (no torch dependency allowed here).
        up = jax.image.resize(emb, (N, C, s, s), method="bilinear")
        l = (max_sz - s) // 2
        r = max_sz - (l + s)
        up = jnp.pad(up, ((0, 0), (0, 0),
                          (l + extra_pad, r + extra_pad),
                          (l + extra_pad, r + extra_pad)))
        outs.append(up[:, None])
    return jnp.concatenate(outs, axis=1), max_sz                 # (N,S,C,Hp,Wp)


def spatial_attention_multiscale_aligned(embeddings, conv_weight, cropsize_list,
                                         kernel_size=3):
    """embeddings: (N, S, C, sz, sz) f32; conv_weight: (1, 2, k, k) f32."""
    k = kernel_size
    p = k // 2

    # Alignment padding and conv zero-padding fused into one halo.
    padded, max_sz = aligned_embedding(embeddings, cropsize_list, extra_pad=p)
    N, S, C, Hp, Wp = padded.shape
    H = W = max_sz
    P = Hp * Wp                                   # 256 for the default config

    # Batch blocking: amortize per-grid-step overhead, but keep >= 2 grid steps
    # whenever N >= 2 so both TensorCores on v7x get work.
    B_blk = max(1, min(4, N // 2)) if N >= 2 else 1
    n_blocks = pl.cdiv(N, B_blk)
    N_pad = n_blocks * B_blk

    # No transposes anywhere: NCHW is kept and HW is flattened (free reshape).
    x = padded.reshape(N, S, C, P).astype(jnp.float32)           # (N,S,C,P)
    if N_pad != N:
        x = jnp.pad(x, ((0, N_pad - N), (0, 0), (0, 0), (0, 0)))
    w_flat = conv_weight.reshape(-1).astype(jnp.float32)         # (2*k*k,)

    kern = functools.partial(_spatial_attn_kernel, ksize=k, padded_w=Wp)

    out = pl.pallas_call(
        kern,
        out_shape=jax.ShapeDtypeStruct((N_pad, C, P), jnp.float32),
        grid_spec=pltpu.PrefetchScalarGridSpec(
            num_scalar_prefetch=0,
            grid=(n_blocks,),
            in_specs=[
                pl.BlockSpec(memory_space=pltpu.MemorySpace.SMEM),       # weight
                pl.BlockSpec((B_blk, S, C, P), lambda b: (b, 0, 0, 0)),  # emb
            ],
            out_specs=pl.BlockSpec((B_blk, C, P), lambda b: (b, 0, 0)),
        ),
        compiler_params=pltpu.CompilerParams(
            dimension_semantics=("parallel",)),
    )(w_flat, x)

    # Drop padded batch rows and the spatial halo; back to NCHW.
    out = out.reshape(N_pad, C, Hp, Wp)[:N, :, p:p + H, p:p + W]
    return out                                                    # (N, C, H, W)


def _reference_attention(aligned, conv_weight):
    """Pure-JAX reference of the attention part (for correctness check)."""
    N, S, C, H, W = aligned.shape
    avg = jnp.mean(aligned, axis=2, keepdims=True)               # (N,S,1,H,W)
    mx = jnp.max(aligned, axis=2, keepdims=True)
    xin = jnp.concatenate([avg, mx], axis=2).reshape(N * S, 2, H, W)
    att = lax.conv_general_dilated(
        xin, conv_weight, window_strides=(1, 1), padding="SAME",
        dimension_numbers=("NCHW", "OIHW", "NCHW"),
        precision=lax.Precision.HIGHEST)
    att = att.reshape(N, S, 1, H, W)
    att = jax.nn.softmax(att, axis=1)
    return jnp.sum(aligned * att, axis=1)                        # (N, C, H, W)


if __name__ == "__main__":
    key = jax.random.PRNGKey(0)
    k_emb, k_w = jax.random.split(key)

    # Small shapes consistent with the module: (batch, seq, C, sz, sz), sz=7.
    N, S, C, sz = 2, 3, 32, 7
    cropsize_list = [64, 96, 128]        # -> interp sizes [7, 11, 14], max_sz=14
    kernel_size = 3

    embeddings = jax.random.normal(k_emb, (N, S, C, sz, sz), dtype=jnp.float32)
    # Deterministic conv weight, shape (out=1, in=2, k, k) like nn.Conv2d(2,1,3).
    conv_weight = 0.2 * jax.random.normal(k_w, (1, 2, kernel_size, kernel_size),
                                          dtype=jnp.float32)

    out = spatial_attention_multiscale_aligned(embeddings, conv_weight,
                                               cropsize_list, kernel_size)
    out = jax.block_until_ready(out)

    # Sanity check against a pure-JAX reference of the attention hot path.
    aligned, _ = aligned_embedding(embeddings, cropsize_list, extra_pad=0)
    ref = jax.block_until_ready(_reference_attention(aligned, conv_weight))

    assert out.shape == (N, C, 14, 14), out.shape
    np.testing.assert_allclose(np.asarray(out), np.asarray(ref),
                               rtol=1e-4, atol=1e-4)

    print("KERNEL_OK")
</pallas_src>

<mosaic_0001>
module attributes {stable_mosaic.version = 11 : i64} {
  func.func @_spatial_attn_kernel(%arg0: i32, %arg1: memref<18xf32, #tpu.memory_space<smem>>, %arg2: memref<1x3x32x256xf32, #tpu.memory_space<vmem>>, %arg3: memref<1x32x256xf32, #tpu.memory_space<vmem>>) attributes {dimension_semantics = [#tpu.dimension_semantics<parallel>], iteration_bounds = array<i64: 2>, scalar_prefetch = 0 : i64, scratch_operands = 0 : i64, tpu.core_type = #tpu.core_type<tc>, window_params = [{transform_indices = @transform_0, window_bounds = array<i64: 18>}, {transform_indices = @transform_1, window_bounds = array<i64: 1, 3, 32, 256>}, {transform_indices = @transform_2, window_bounds = array<i64: 1, 32, 256>}]} {
    %c0 = arith.constant 0 : index
    %c0_0 = arith.constant 0 : index
    %c0_1 = arith.constant 0 : index
    %c0_2 = arith.constant 0 : index
    %0 = vector.load %arg2[%c0, %c0_0, %c0_1, %c0_2] : memref<1x3x32x256xf32, #tpu.memory_space<vmem>>, vector<1x1x32x256xf32>
    %1 = vector.shape_cast %0 : vector<1x1x32x256xf32> to vector<1x32x256xf32>
    %cst = arith.constant dense<0.000000e+00> : vector<1x256xf32>
    %2 = vector.multi_reduction <add>, %1, %cst [1] : vector<1x32x256xf32> to vector<1x256xf32>
    %cst_3 = arith.constant 3.200000e+01 : f32
    %3 = vector.broadcast %cst_3 : f32 to vector<1x256xf32>
    %4 = arith.divf %2, %3 : vector<1x256xf32>
    %cst_4 = arith.constant dense<0xFF800000> : vector<1x256xf32>
    %5 = vector.multi_reduction <maximumf>, %1, %cst_4 [1] : vector<1x32x256xf32> to vector<1x256xf32>
    %c0_5 = arith.constant 0 : index
    %c1 = arith.constant 1 : index
    %c0_6 = arith.constant 0 : index
    %c0_7 = arith.constant 0 : index
    %6 = vector.load %arg2[%c0_5, %c1, %c0_6, %c0_7] : memref<1x3x32x256xf32, #tpu.memory_space<vmem>>, vector<1x1x32x256xf32>
    %7 = vector.shape_cast %6 : vector<1x1x32x256xf32> to vector<1x32x256xf32>
    %cst_8 = arith.constant dense<0.000000e+00> : vector<1x256xf32>
    %8 = vector.multi_reduction <add>, %7, %cst_8 [1] : vector<1x32x256xf32> to vector<1x256xf32>
    %cst_9 = arith.constant 3.200000e+01 : f32
    %9 = vector.broadcast %cst_9 : f32 to vector<1x256xf32>
    %10 = arith.divf %8, %9 : vector<1x256xf32>
    %cst_10 = arith.constant dense<0xFF800000> : vector<1x256xf32>
    %11 = vector.multi_reduction <maximumf>, %7, %cst_10 [1] : vector<1x32x256xf32> to vector<1x256xf32>
    %c0_11 = arith.constant 0 : index
    %c2 = arith.constant 2 : index
    %c0_12 = arith.constant 0 : index
    %c0_13 = arith.constant 0 : index
    %12 = vector.load %arg2[%c0_11, %c2, %c0_12, %c0_13] : memref<1x3x32x256xf32, #tpu.memory_space<vmem>>, vector<1x1x32x256xf32>
    %13 = vector.shape_cast %12 : vector<1x1x32x256xf32> to vector<1x32x256xf32>
    %cst_14 = arith.constant dense<0.000000e+00> : vector<1x256xf32>
    %14 = vector.multi_reduction <add>, %13, %cst_14 [1] : vector<1x32x256xf32> to vector<1x256xf32>
    %cst_15 = arith.constant 3.200000e+01 : f32
    %15 = vector.broadcast %cst_15 : f32 to vector<1x256xf32>
    %16 = arith.divf %14, %15 : vector<1x256xf32>
    %cst_16 = arith.constant dense<0xFF800000> : vector<1x256xf32>
    %17 = vector.multi_reduction <maximumf>, %13, %cst_16 [1] : vector<1x32x256xf32> to vector<1x256xf32>
    %cst_17 = arith.constant 0.000000e+00 : f32
    %18 = vector.broadcast %cst_17 : f32 to vector<1x256xf32>
    %c0_18 = arith.constant 0 : index
    %19 = memref.load %arg1[%c0_18] : memref<18xf32, #tpu.memory_space<smem>>
    %c9 = arith.constant 9 : index
    %20 = memref.load %arg1[%c9] : memref<18xf32, #tpu.memory_space<smem>>
    %c17_i32 = arith.constant 17 : i32
    %21 = tpu.dynamic_rotate %4 by %c17_i32 dim 1 : vector<1x256xf32>, i32 -> vector<1x256xf32>
    %22 = vector.broadcast %19 : f32 to vector<1x256xf32>
    %23 = arith.mulf %22, %21 : vector<1x256xf32>
    %24 = arith.addf %18, %23 : vector<1x256xf32>
    %c17_i32_19 = arith.constant 17 : i32
    %25 = tpu.dynamic_rotate %5 by %c17_i32_19 dim 1 : vector<1x256xf32>, i32 -> vector<1x256xf32>
    %26 = vector.broadcast %20 : f32 to vector<1x256xf32>
    %27 = arith.mulf %26, %25 : vector<1x256xf32>
    %28 = arith.addf %24, %27 : vector<1x256xf32>
    %c1_20 = arith.constant 1 : index
    %29 = memref.load %arg1[%c1_20] : memref<18xf32, #tpu.memory_space<smem>>
    %c10 = arith.constant 10 : index
    %30 = memref.load %arg1[%c10] : memref<18xf32, #tpu.memory_space<smem>>
    %c16_i32 = arith.constant 16 : i32
    %31 = tpu.dynamic_rotate %4 by %c16_i32 dim 1 : vector<1x256xf32>, i32 -> vector<1x256xf32>
    %32 = vector.broadcast %29 : f32 to vector<1x256xf32>
    %33 = arith.mulf %32, %31 : vector<1x256xf32>
    %34 = arith.addf %28, %33 : vector<1x256xf32>
    %c16_i32_21 = arith.constant 16 : i32
    %35 = tpu.dynamic_rotate %5 by %c16_i32_21 dim 1 : vector<1x256xf32>, i32 -> vector<1x256xf32>
    %36 = vector.broadcast %30 : f32 to vector<1x256xf32>
    %37 = arith.mulf %36, %35 : vector<1x256xf32>
    %38 = arith.addf %34, %37 : vector<1x256xf32>
    %c2_22 = arith.constant 2 : index
    %39 = memref.load %arg1[%c2_22] : memref<18xf32, #tpu.memory_space<smem>>
    %c11 = arith.constant 11 : index
    %40 = memref.load %arg1[%c11] : memref<18xf32, #tpu.memory_space<smem>>
    %c15_i32 = arith.constant 15 : i32
    %41 = tpu.dynamic_rotate %4 by %c15_i32 dim 1 : vector<1x256xf32>, i32 -> vector<1x256xf32>
    %42 = vector.broadcast %39 : f32 to vector<1x256xf32>
    %43 = arith.mulf %42, %41 : vector<1x256xf32>
    %44 = arith.addf %38, %43 : vector<1x256xf32>
    %c15_i32_23 = arith.constant 15 : i32
    %45 = tpu.dynamic_rotate %5 by %c15_i32_23 dim 1 : vector<1x256xf32>, i32 -> vector<1x256xf32>
    %46 = vector.broadcast %40 : f32 to vector<1x256xf32>
    %47 = arith.mulf %46, %45 : vector<1x256xf32>
    %48 = arith.addf %44, %47 : vector<1x256xf32>
    %c3 = arith.constant 3 : index
    %49 = memref.load %arg1[%c3] : memref<18xf32, #tpu.memory_space<smem>>
    %c12 = arith.constant 12 : index
    %50 = memref.load %arg1[%c12] : memref<18xf32, #tpu.memory_space<smem>>
    %c1_i32 = arith.constant 1 : i32
    %51 = tpu.dynamic_rotate %4 by %c1_i32 dim 1 : vector<1x256xf32>, i32 -> vector<1x256xf32>
    %52 = vector.broadcast %49 : f32 to vector<1x256xf32>
    %53 = arith.mulf %52, %51 : vector<1x256xf32>
    %54 = arith.addf %48, %53 : vector<1x256xf32>
    %c1_i32_24 = arith.constant 1 : i32
    %55 = tpu.dynamic_rotate %5 by %c1_i32_24 dim 1 : vector<1x256xf32>, i32 -> vector<1x256xf32>
    %56 = vector.broadcast %50 : f32 to vector<1x256xf32>
    %57 = arith.mulf %56, %55 : vector<1x256xf32>
    %58 = arith.addf %54, %57 : vector<1x256xf32>
    %c4 = arith.constant 4 : index
    %59 = memref.load %arg1[%c4] : memref<18xf32, #tpu.memory_space<smem>>
    %c13 = arith.constant 13 : index
    %60 = memref.load %arg1[%c13] : memref<18xf32, #tpu.memory_space<smem>>
    %61 = vector.broadcast %59 : f32 to vector<1x256xf32>
    %62 = arith.mulf %61, %4 : vector<1x256xf32>
    %63 = arith.addf %58, %62 : vector<1x256xf32>
    %64 = vector.broadcast %60 : f32 to vector<1x256xf32>
    %65 = arith.mulf %64, %5 : vector<1x256xf32>
    %66 = arith.addf %63, %65 : vector<1x256xf32>
    %c5 = arith.constant 5 : index
    %67 = memref.load %arg1[%c5] : memref<18xf32, #tpu.memory_space<smem>>
    %c14 = arith.constant 14 : index
    %68 = memref.load %arg1[%c14] : memref<18xf32, #tpu.memory_space<smem>>
    %c255_i32 = arith.constant 255 : i32
    %69 = tpu.dynamic_rotate %4 by %c255_i32 dim 1 : vector<1x256xf32>, i32 -> vector<1x256xf32>
    %70 = vector.broadcast %67 : f32 to vector<1x256xf32>
    %71 = arith.mulf %70, %69 : vector<1x256xf32>
    %72 = arith.addf %66, %71 : vector<1x256xf32>
    %c255_i32_25 = arith.constant 255 : i32
    %73 = tpu.dynamic_rotate %5 by %c255_i32_25 dim 1 : vector<1x256xf32>, i32 -> vector<1x256xf32>
    %74 = vector.broadcast %68 : f32 to vector<1x256xf32>
    %75 = arith.mulf %74, %73 : vector<1x256xf32>
    %76 = arith.addf %72, %75 : vector<1x256xf32>
    %c6 = arith.constant 6 : index
    %77 = memref.load %arg1[%c6] : memref<18xf32, #tpu.memory_space<smem>>
    %c15 = arith.constant 15 : index
    %78 = memref.load %arg1[%c15] : memref<18xf32, #tpu.memory_space<smem>>
    %c241_i32 = arith.constant 241 : i32
    %79 = tpu.dynamic_rotate %4 by %c241_i32 dim 1 : vector<1x256xf32>, i32 -> vector<1x256xf32>
    %80 = vector.broadcast %77 : f32 to vector<1x256xf32>
    %81 = arith.mulf %80, %79 : vector<1x256xf32>
    %82 = arith.addf %76, %81 : vector<1x256xf32>
    %c241_i32_26 = arith.constant 241 : i32
    %83 = tpu.dynamic_rotate %5 by %c241_i32_26 dim 1 : vector<1x256xf32>, i32 -> vector<1x256xf32>
    %84 = vector.broadcast %78 : f32 to vector<1x256xf32>
    %85 = arith.mulf %84, %83 : vector<1x256xf32>
    %86 = arith.addf %82, %85 : vector<1x256xf32>
    %c7 = arith.constant 7 : index
    %87 = memref.load %arg1[%c7] : memref<18xf32, #tpu.memory_space<smem>>
    %c16 = arith.constant 16 : index
    %88 = memref.load %arg1[%c16] : memref<18xf32, #tpu.memory_space<smem>>
    %c240_i32 = arith.constant 240 : i32
    %89 = tpu.dynamic_rotate %4 by %c240_i32 dim 1 : vector<1x256xf32>, i32 -> vector<1x256xf32>
    %90 = vector.broadcast %87 : f32 to vector<1x256xf32>
    %91 = arith.mulf %90, %89 : vector<1x256xf32>
    %92 = arith.addf %86, %91 : vector<1x256xf32>
    %c240_i32_27 = arith.constant 240 : i32
    %93 = tpu.dynamic_rotate %5 by %c240_i32_27 dim 1 : vector<1x256xf32>, i32 -> vector<1x256xf32>
    %94 = vector.broadcast %88 : f32 to vector<1x256xf32>
    %95 = arith.mulf %94, %93 : vector<1x256xf32>
    %96 = arith.addf %92, %95 : vector<1x256xf32>
    %c8 = arith.constant 8 : index
    %97 = memref.load %arg1[%c8] : memref<18xf32, #tpu.memory_space<smem>>
    %c17 = arith.constant 17 : index
    %98 = memref.load %arg1[%c17] : memref<18xf32, #tpu.memory_space<smem>>
    %c239_i32 = arith.constant 239 : i32
    %99 = tpu.dynamic_rotate %4 by %c239_i32 dim 1 : vector<1x256xf32>, i32 -> vector<1x256xf32>
    %100 = vector.broadcast %97 : f32 to vector<1x256xf32>
    %101 = arith.mulf %100, %99 : vector<1x256xf32>
    %102 = arith.addf %96, %101 : vector<1x256xf32>
    %c239_i32_28 = arith.constant 239 : i32
    %103 = tpu.dynamic_rotate %5 by %c239_i32_28 dim 1 : vector<1x256xf32>, i32 -> vector<1x256xf32>
    %104 = vector.broadcast %98 : f32 to vector<1x256xf32>
    %105 = arith.mulf %104, %103 : vector<1x256xf32>
    %106 = arith.addf %102, %105 : vector<1x256xf32>
    %cst_29 = arith.constant 0.000000e+00 : f32
    %107 = vector.broadcast %cst_29 : f32 to vector<1x256xf32>
    %c0_30 = arith.constant 0 : index
    %108 = memref.load %arg1[%c0_30] : memref<18xf32, #tpu.memory_space<smem>>
    %c9_31 = arith.constant 9 : index
    %109 = memref.load %arg1[%c9_31] : memref<18xf32, #tpu.memory_space<smem>>
    %c17_i32_32 = arith.constant 17 : i32
    %110 = tpu.dynamic_rotate %10 by %c17_i32_32 dim 1 : vector<1x256xf32>, i32 -> vector<1x256xf32>
    %111 = vector.broadcast %108 : f32 to vector<1x256xf32>
    %112 = arith.mulf %111, %110 : vector<1x256xf32>
    %113 = arith.addf %107, %112 : vector<1x256xf32>
    %c17_i32_33 = arith.constant 17 : i32
    %114 = tpu.dynamic_rotate %11 by %c17_i32_33 dim 1 : vector<1x256xf32>, i32 -> vector<1x256xf32>
    %115 = vector.broadcast %109 : f32 to vector<1x256xf32>
    %116 = arith.mulf %115, %114 : vector<1x256xf32>
    %117 = arith.addf %113, %116 : vector<1x256xf32>
    %c1_34 = arith.constant 1 : index
    %118 = memref.load %arg1[%c1_34] : memref<18xf32, #tpu.memory_space<smem>>
    %c10_35 = arith.constant 10 : index
    %119 = memref.load %arg1[%c10_35] : memref<18xf32, #tpu.memory_space<smem>>
    %c16_i32_36 = arith.constant 16 : i32
    %120 = tpu.dynamic_rotate %10 by %c16_i32_36 dim 1 : vector<1x256xf32>, i32 -> vector<1x256xf32>
    %121 = vector.broadcast %118 : f32 to vector<1x256xf32>
    %122 = arith.mulf %121, %120 : vector<1x256xf32>
    %123 = arith.addf %117, %122 : vector<1x256xf32>
    %c16_i32_37 = arith.constant 16 : i32
    %124 = tpu.dynamic_rotate %11 by %c16_i32_37 dim 1 : vector<1x256xf32>, i32 -> vector<1x256xf32>
    %125 = vector.broadcast %119 : f32 to vector<1x256xf32>
    %126 = arith.mulf %125, %124 : vector<1x256xf32>
    %127 = arith.addf %123, %126 : vector<1x256xf32>
    %c2_38 = arith.constant 2 : index
    %128 = memref.load %arg1[%c2_38] : memref<18xf32, #tpu.memory_space<smem>>
    %c11_39 = arith.constant 11 : index
    %129 = memref.load %arg1[%c11_39] : memref<18xf32, #tpu.memory_space<smem>>
    %c15_i32_40 = arith.constant 15 : i32
    %130 = tpu.dynamic_rotate %10 by %c15_i32_40 dim 1 : vector<1x256xf32>, i32 -> vector<1x256xf32>
    %131 = vector.broadcast %128 : f32 to vector<1x256xf32>
    %132 = arith.mulf %131, %130 : vector<1x256xf32>
    %133 = arith.addf %127, %132 : vector<1x256xf32>
    %c15_i32_41 = arith.constant 15 : i32
    %134 = tpu.dynamic_rotate %11 by %c15_i32_41 dim 1 : vector<1x256xf32>, i32 -> vector<1x256xf32>
    %135 = vector.broadcast %129 : f32 to vector<1x256xf32>
    %136 = arith.mulf %135, %134 : vector<1x256xf32>
    %137 = arith.addf %133, %136 : vector<1x256xf32>
    %c3_42 = arith.constant 3 : index
    %138 = memref.load %arg1[%c3_42] : memref<18xf32, #tpu.memory_space<smem>>
    %c12_43 = arith.constant 12 : index
    %139 = memref.load %arg1[%c12_43] : memref<18xf32, #tpu.memory_space<smem>>
    %c1_i32_44 = arith.constant 1 : i32
    %140 = tpu.dynamic_rotate %10 by %c1_i32_44 dim 1 : vector<1x256xf32>, i32 -> vector<1x256xf32>
    %141 = vector.broadcast %138 : f32 to vector<1x256xf32>
    %142 = arith.mulf %141, %140 : vector<1x256xf32>
    %143 = arith.addf %137, %142 : vector<1x256xf32>
    %c1_i32_45 = arith.constant 1 : i32
    %144 = tpu.dynamic_rotate %11 by %c1_i32_45 dim 1 : vector<1x256xf32>, i32 -> vector<1x256xf32>
    %145 = vector.broadcast %139 : f32 to vector<1x256xf32>
    %146 = arith.mulf %145, %144 : vector<1x256xf32>
    %147 = arith.addf %143, %146 : vector<1x256xf32>
    %c4_46 = arith.constant 4 : index
    %148 = memref.load %arg1[%c4_46] : memref<18xf32, #tpu.memory_space<smem>>
    %c13_47 = arith.constant 13 : index
    %149 = memref.load %arg1[%c13_47] : memref<18xf32, #tpu.memory_space<smem>>
    %150 = vector.broadcast %148 : f32 to vector<1x256xf32>
    %151 = arith.mulf %150, %10 : vector<1x256xf32>
    %152 = arith.addf %147, %151 : vector<1x256xf32>
    %153 = vector.broadcast %149 : f32 to vector<1x256xf32>
    %154 = arith.mulf %153, %11 : vector<1x256xf32>
    %155 = arith.addf %152, %154 : vector<1x256xf32>
    %c5_48 = arith.constant 5 : index
    %156 = memref.load %arg1[%c5_48] : memref<18xf32, #tpu.memory_space<smem>>
    %c14_49 = arith.constant 14 : index
    %157 = memref.load %arg1[%c14_49] : memref<18xf32, #tpu.memory_space<smem>>
    %c255_i32_50 = arith.constant 255 : i32
    %158 = tpu.dynamic_rotate %10 by %c255_i32_50 dim 1 : vector<1x256xf32>, i32 -> vector<1x256xf32>
    %159 = vector.broadcast %156 : f32 to vector<1x256xf32>
    %160 = arith.mulf %159, %158 : vector<1x256xf32>
    %161 = arith.addf %155, %160 : vector<1x256xf32>
    %c255_i32_51 = arith.constant 255 : i32
    %162 = tpu.dynamic_rotate %11 by %c255_i32_51 dim 1 : vector<1x256xf32>, i32 -> vector<1x256xf32>
    %163 = vector.broadcast %157 : f32 to vector<1x256xf32>
    %164 = arith.mulf %163, %162 : vector<1x256xf32>
    %165 = arith.addf %161, %164 : vector<1x256xf32>
    %c6_52 = arith.constant 6 : index
    %166 = memref.load %arg1[%c6_52] : memref<18xf32, #tpu.memory_space<smem>>
    %c15_53 = arith.constant 15 : index
    %167 = memref.load %arg1[%c15_53] : memref<18xf32, #tpu.memory_space<smem>>
    %c241_i32_54 = arith.constant 241 : i32
    %168 = tpu.dynamic_rotate %10 by %c241_i32_54 dim 1 : vector<1x256xf32>, i32 -> vector<1x256xf32>
    %169 = vector.broadcast %166 : f32 to vector<1x256xf32>
    %170 = arith.mulf %169, %168 : vector<1x256xf32>
    %171 = arith.addf %165, %170 : vector<1x256xf32>
    %c241_i32_55 = arith.constant 241 : i32
    %172 = tpu.dynamic_rotate %11 by %c241_i32_55 dim 1 : vector<1x256xf32>, i32 -> vector<1x256xf32>
    %173 = vector.broadcast %167 : f32 to vector<1x256xf32>
    %174 = arith.mulf %173, %172 : vector<1x256xf32>
    %175 = arith.addf %171, %174 : vector<1x256xf32>
    %c7_56 = arith.constant 7 : index
    %176 = memref.load %arg1[%c7_56] : memref<18xf32, #tpu.memory_space<smem>>
    %c16_57 = arith.constant 16 : index
    %177 = memref.load %arg1[%c16_57] : memref<18xf32, #tpu.memory_space<smem>>
    %c240_i32_58 = arith.constant 240 : i32
    %178 = tpu.dynamic_rotate %10 by %c240_i32_58 dim 1 : vector<1x256xf32>, i32 -> vector<1x256xf32>
    %179 = vector.broadcast %176 : f32 to vector<1x256xf32>
    %180 = arith.mulf %179, %178 : vector<1x256xf32>
    %181 = arith.addf %175, %180 : vector<1x256xf32>
    %c240_i32_59 = arith.constant 240 : i32
    %182 = tpu.dynamic_rotate %11 by %c240_i32_59 dim 1 : vector<1x256xf32>, i32 -> vector<1x256xf32>
    %183 = vector.broadcast %177 : f32 to vector<1x256xf32>
    %184 = arith.mulf %183, %182 : vector<1x256xf32>
    %185 = arith.addf %181, %184 : vector<1x256xf32>
    %c8_60 = arith.constant 8 : index
    %186 = memref.load %arg1[%c8_60] : memref<18xf32, #tpu.memory_space<smem>>
    %c17_61 = arith.constant 17 : index
    %187 = memref.load %arg1[%c17_61] : memref<18xf32, #tpu.memory_space<smem>>
    %c239_i32_62 = arith.constant 239 : i32
    %188 = tpu.dynamic_rotate %10 by %c239_i32_62 dim 1 : vector<1x256xf32>, i32 -> vector<1x256xf32>
    %189 = vector.broadcast %186 : f32 to vector<1x256xf32>
    %190 = arith.mulf %189, %188 : vector<1x256xf32>
    %191 = arith.addf %185, %190 : vector<1x256xf32>
    %c239_i32_63 = arith.constant 239 : i32
    %192 = tpu.dynamic_rotate %11 by %c239_i32_63 dim 1 : vector<1x256xf32>, i32 -> vector<1x256xf32>
    %193 = vector.broadcast %187 : f32 to vector<1x256xf32>
    %194 = arith.mulf %193, %192 : vector<1x256xf32>
    %195 = arith.addf %191, %194 : vector<1x256xf32>
    %cst_64 = arith.constant 0.000000e+00 : f32
    %196 = vector.broadcast %cst_64 : f32 to vector<1x256xf32>
    %c0_65 = arith.constant 0 : index
    %197 = memref.load %arg1[%c0_65] : memref<18xf32, #tpu.memory_space<smem>>
    %c9_66 = arith.constant 9 : index
    %198 = memref.load %arg1[%c9_66] : memref<18xf32, #tpu.memory_space<smem>>
    %c17_i32_67 = arith.constant 17 : i32
    %199 = tpu.dynamic_rotate %16 by %c17_i32_67 dim 1 : vector<1x256xf32>, i32 -> vector<1x256xf32>
    %200 = vector.broadcast %197 : f32 to vector<1x256xf32>
    %201 = arith.mulf %200, %199 : vector<1x256xf32>
    %202 = arith.addf %196, %201 : vector<1x256xf32>
    %c17_i32_68 = arith.constant 17 : i32
    %203 = tpu.dynamic_rotate %17 by %c17_i32_68 dim 1 : vector<1x256xf32>, i32 -> vector<1x256xf32>
    %204 = vector.broadcast %198 : f32 to vector<1x256xf32>
    %205 = arith.mulf %204, %203 : vector<1x256xf32>
    %206 = arith.addf %202, %205 : vector<1x256xf32>
    %c1_69 = arith.constant 1 : index
    %207 = memref.load %arg1[%c1_69] : memref<18xf32, #tpu.memory_space<smem>>
    %c10_70 = arith.constant 10 : index
    %208 = memref.load %arg1[%c10_70] : memref<18xf32, #tpu.memory_space<smem>>
    %c16_i32_71 = arith.constant 16 : i32
    %209 = tpu.dynamic_rotate %16 by %c16_i32_71 dim 1 : vector<1x256xf32>, i32 -> vector<1x256xf32>
    %210 = vector.broadcast %207 : f32 to vector<1x256xf32>
    %211 = arith.mulf %210, %209 : vector<1x256xf32>
    %212 = arith.addf %206, %211 : vector<1x256xf32>
    %c16_i32_72 = arith.constant 16 : i32
    %213 = tpu.dynamic_rotate %17 by %c16_i32_72 dim 1 : vector<1x256xf32>, i32 -> vector<1x256xf32>
    %214 = vector.broadcast %208 : f32 to vector<1x256xf32>
    %215 = arith.mulf %214, %213 : vector<1x256xf32>
    %216 = arith.addf %212, %215 : vector<1x256xf32>
    %c2_73 = arith.constant 2 : index
    %217 = memref.load %arg1[%c2_73] : memref<18xf32, #tpu.memory_space<smem>>
    %c11_74 = arith.constant 11 : index
    %218 = memref.load %arg1[%c11_74] : memref<18xf32, #tpu.memory_space<smem>>
    %c15_i32_75 = arith.constant 15 : i32
    %219 = tpu.dynamic_rotate %16 by %c15_i32_75 dim 1 : vector<1x256xf32>, i32 -> vector<1x256xf32>
    %220 = vector.broadcast %217 : f32 to vector<1x256xf32>
    %221 = arith.mulf %220, %219 : vector<1x256xf32>
    %222 = arith.addf %216, %221 : vector<1x256xf32>
    %c15_i32_76 = arith.constant 15 : i32
    %223 = tpu.dynamic_rotate %17 by %c15_i32_76 dim 1 : vector<1x256xf32>, i32 -> vector<1x256xf32>
    %224 = vector.broadcast %218 : f32 to vector<1x256xf32>
    %225 = arith.mulf %224, %223 : vector<1x256xf32>
    %226 = arith.addf %222, %225 : vector<1x256xf32>
    %c3_77 = arith.constant 3 : index
    %227 = memref.load %arg1[%c3_77] : memref<18xf32, #tpu.memory_space<smem>>
    %c12_78 = arith.constant 12 : index
    %228 = memref.load %arg1[%c12_78] : memref<18xf32, #tpu.memory_space<smem>>
    %c1_i32_79 = arith.constant 1 : i32
    %229 = tpu.dynamic_rotate %16 by %c1_i32_79 dim 1 : vector<1x256xf32>, i32 -> vector<1x256xf32>
    %230 = vector.broadcast %227 : f32 to vector<1x256xf32>
    %231 = arith.mulf %230, %229 : vector<1x256xf32>
    %232 = arith.addf %226, %231 : vector<1x256xf32>
    %c1_i32_80 = arith.constant 1 : i32
    %233 = tpu.dynamic_rotate %17 by %c1_i32_80 dim 1 : vector<1x256xf32>, i32 -> vector<1x256xf32>
    %234 = vector.broadcast %228 : f32 to vector<1x256xf32>
    %235 = arith.mulf %234, %233 : vector<1x256xf32>
    %236 = arith.addf %232, %235 : vector<1x256xf32>
    %c4_81 = arith.constant 4 : index
    %237 = memref.load %arg1[%c4_81] : memref<18xf32, #tpu.memory_space<smem>>
    %c13_82 = arith.constant 13 : index
    %238 = memref.load %arg1[%c13_82] : memref<18xf32, #tpu.memory_space<smem>>
    %239 = vector.broadcast %237 : f32 to vector<1x256xf32>
    %240 = arith.mulf %239, %16 : vector<1x256xf32>
    %241 = arith.addf %236, %240 : vector<1x256xf32>
    %242 = vector.broadcast %238 : f32 to vector<1x256xf32>
    %243 = arith.mulf %242, %17 : vector<1x256xf32>
    %244 = arith.addf %241, %243 : vector<1x256xf32>
    %c5_83 = arith.constant 5 : index
    %245 = memref.load %arg1[%c5_83] : memref<18xf32, #tpu.memory_space<smem>>
    %c14_84 = arith.constant 14 : index
    %246 = memref.load %arg1[%c14_84] : memref<18xf32, #tpu.memory_space<smem>>
    %c255_i32_85 = arith.constant 255 : i32
    %247 = tpu.dynamic_rotate %16 by %c255_i32_85 dim 1 : vector<1x256xf32>, i32 -> vector<1x256xf32>
    %248 = vector.broadcast %245 : f32 to vector<1x256xf32>
    %249 = arith.mulf %248, %247 : vector<1x256xf32>
    %250 = arith.addf %244, %249 : vector<1x256xf32>
    %c255_i32_86 = arith.constant 255 : i32
    %251 = tpu.dynamic_rotate %17 by %c255_i32_86 dim 1 : vector<1x256xf32>, i32 -> vector<1x256xf32>
    %252 = vector.broadcast %246 : f32 to vector<1x256xf32>
    %253 = arith.mulf %252, %251 : vector<1x256xf32>
    %254 = arith.addf %250, %253 : vector<1x256xf32>
    %c6_87 = arith.constant 6 : index
    %255 = memref.load %arg1[%c6_87] : memref<18xf32, #tpu.memory_space<smem>>
    %c15_88 = arith.constant 15 : index
    %256 = memref.load %arg1[%c15_88] : memref<18xf32, #tpu.memory_space<smem>>
    %c241_i32_89 = arith.constant 241 : i32
    %257 = tpu.dynamic_rotate %16 by %c241_i32_89 dim 1 : vector<1x256xf32>, i32 -> vector<1x256xf32>
    %258 = vector.broadcast %255 : f32 to vector<1x256xf32>
    %259 = arith.mulf %258, %257 : vector<1x256xf32>
    %260 = arith.addf %254, %259 : vector<1x256xf32>
    %c241_i32_90 = arith.constant 241 : i32
    %261 = tpu.dynamic_rotate %17 by %c241_i32_90 dim 1 : vector<1x256xf32>, i32 -> vector<1x256xf32>
    %262 = vector.broadcast %256 : f32 to vector<1x256xf32>
    %263 = arith.mulf %262, %261 : vector<1x256xf32>
    %264 = arith.addf %260, %263 : vector<1x256xf32>
    %c7_91 = arith.constant 7 : index
    %265 = memref.load %arg1[%c7_91] : memref<18xf32, #tpu.memory_space<smem>>
    %c16_92 = arith.constant 16 : index
    %266 = memref.load %arg1[%c16_92] : memref<18xf32, #tpu.memory_space<smem>>
    %c240_i32_93 = arith.constant 240 : i32
    %267 = tpu.dynamic_rotate %16 by %c240_i32_93 dim 1 : vector<1x256xf32>, i32 -> vector<1x256xf32>
    %268 = vector.broadcast %265 : f32 to vector<1x256xf32>
    %269 = arith.mulf %268, %267 : vector<1x256xf32>
    %270 = arith.addf %264, %269 : vector<1x256xf32>
    %c240_i32_94 = arith.constant 240 : i32
    %271 = tpu.dynamic_rotate %17 by %c240_i32_94 dim 1 : vector<1x256xf32>, i32 -> vector<1x256xf32>
    %272 = vector.broadcast %266 : f32 to vector<1x256xf32>
    %273 = arith.mulf %272, %271 : vector<1x256xf32>
    %274 = arith.addf %270, %273 : vector<1x256xf32>
    %c8_95 = arith.constant 8 : index
    %275 = memref.load %arg1[%c8_95] : memref<18xf32, #tpu.memory_space<smem>>
    %c17_96 = arith.constant 17 : index
    %276 = memref.load %arg1[%c17_96] : memref<18xf32, #tpu.memory_space<smem>>
    %c239_i32_97 = arith.constant 239 : i32
    %277 = tpu.dynamic_rotate %16 by %c239_i32_97 dim 1 : vector<1x256xf32>, i32 -> vector<1x256xf32>
    %278 = vector.broadcast %275 : f32 to vector<1x256xf32>
    %279 = arith.mulf %278, %277 : vector<1x256xf32>
    %280 = arith.addf %274, %279 : vector<1x256xf32>
    %c239_i32_98 = arith.constant 239 : i32
    %281 = tpu.dynamic_rotate %17 by %c239_i32_98 dim 1 : vector<1x256xf32>, i32 -> vector<1x256xf32>
    %282 = vector.broadcast %276 : f32 to vector<1x256xf32>
    %283 = arith.mulf %282, %281 : vector<1x256xf32>
    %284 = arith.addf %280, %283 : vector<1x256xf32>
    %285 = arith.maximumf %106, %195 : vector<1x256xf32>
    %286 = arith.maximumf %285, %284 : vector<1x256xf32>
    %287 = arith.subf %106, %286 : vector<1x256xf32>
    %288 = math.exp %287 : vector<1x256xf32>
    %289 = arith.subf %195, %286 : vector<1x256xf32>
    %290 = math.exp %289 : vector<1x256xf32>
    %291 = arith.subf %284, %286 : vector<1x256xf32>
    %292 = math.exp %291 : vector<1x256xf32>
    %293 = arith.addf %288, %290 : vector<1x256xf32>
    %294 = arith.addf %293, %292 : vector<1x256xf32>
    %295 = tpu.reciprocal %294 {approx = true} : vector<1x256xf32> -> vector<1x256xf32>
    %296 = arith.mulf %294, %295 : vector<1x256xf32>
    %cst_99 = arith.constant 2.000000e+00 : f32
    %297 = vector.broadcast %cst_99 : f32 to vector<1x256xf32>
    %298 = arith.subf %297, %296 : vector<1x256xf32>
    %299 = arith.mulf %295, %298 : vector<1x256xf32>
    %300 = arith.mulf %288, %299 : vector<1x256xf32>
    %301 = arith.mulf %290, %299 : vector<1x256xf32>
    %302 = arith.mulf %292, %299 : vector<1x256xf32>
    %c0_100 = arith.constant 0 : index
    %c0_101 = arith.constant 0 : index
    %c0_102 = arith.constant 0 : index
    %c0_103 = arith.constant 0 : index
    %303 = vector.load %arg2[%c0_100, %c0_101, %c0_102, %c0_103] : memref<1x3x32x256xf32, #tpu.memory_space<vmem>>, vector<1x1x32x256xf32>
    %304 = vector.shape_cast %303 : vector<1x1x32x256xf32> to vector<32x256xf32>
    %305 = vector.broadcast %300 : vector<1x256xf32> to vector<32x256xf32>
    %306 = arith.mulf %304, %305 : vector<32x256xf32>
    %c0_104 = arith.constant 0 : index
    %c1_105 = arith.constant 1 : index
    %c0_106 = arith.constant 0 : index
    %c0_107 = arith.constant 0 : index
    %307 = vector.load %arg2[%c0_104, %c1_105, %c0_106, %c0_107] : memref<1x3x32x256xf32, #tpu.memory_space<vmem>>, vector<1x1x32x256xf32>
    %308 = vector.shape_cast %307 : vector<1x1x32x256xf32> to vector<32x256xf32>
    %309 = vector.broadcast %301 : vector<1x256xf32> to vector<32x256xf32>
    %310 = arith.mulf %308, %309 : vector<32x256xf32>
    %311 = arith.addf %306, %310 : vector<32x256xf32>
    %c0_108 = arith.constant 0 : index
    %c2_109 = arith.constant 2 : index
    %c0_110 = arith.constant 0 : index
    %c0_111 = arith.constant 0 : index
    %312 = vector.load %arg2[%c0_108, %c2_109, %c0_110, %c0_111] : memref<1x3x32x256xf32, #tpu.memory_space<vmem>>, vector<1x1x32x256xf32>
    %313 = vector.shape_cast %312 : vector<1x1x32x256xf32> to vector<32x256xf32>
    %314 = vector.broadcast %302 : vector<1x256xf32> to vector<32x256xf32>
    %315 = arith.mulf %313, %314 : vector<32x256xf32>
    %316 = arith.addf %311, %315 : vector<32x256xf32>
    %c0_112 = arith.constant 0 : index
    %c0_113 = arith.constant 0 : index
    %c0_114 = arith.constant 0 : index
    %317 = vector.load %arg3[%c0_112, %c0_113, %c0_114] : memref<1x32x256xf32, #tpu.memory_space<vmem>>, vector<1x32x256xf32>
    %318 = vector.shape_cast %317 : vector<1x32x256xf32> to vector<32x256xf32>
    %319 = vector.shape_cast %316 : vector<32x256xf32> to vector<1x32x256xf32>
    tpu.vector_store %arg3[%c0_112, %c0_113, %c0_114], %319 {strides = array<i32>} : memref<1x32x256xf32, #tpu.memory_space<vmem>>, vector<1x32x256xf32>,
    return
  }
  func.func @transform_0(%arg0: i32) -> i32 {
    %c0_i32 = arith.constant 0 : i32
    %c0_i32_0 = arith.constant 0 : i32
    return %c0_i32 : i32
  }
  func.func @transform_1(%arg0: i32) -> (i32, i32, i32, i32) {
    %c0_i32 = arith.constant 0 : i32
    %c0_i32_0 = arith.constant 0 : i32
    %c0_i32_1 = arith.constant 0 : i32
    %c0_i32_2 = arith.constant 0 : i32
    return %arg0, %c0_i32, %c0_i32_0, %c0_i32_1 : i32, i32, i32, i32
  }
  func.func @transform_2(%arg0: i32) -> (i32, i32, i32) {
    %c0_i32 = arith.constant 0 : i32
    %c0_i32_0 = arith.constant 0 : i32
    %c0_i32_1 = arith.constant 0 : i32
    return %arg0, %c0_i32, %c0_i32_0 : i32, i32, i32
  }
}

</mosaic_0001>

<llo_original>
// kernel: tpu_custom_call.1
$region0: #{tpu_custom_call.1}
  #allocation0 [shape = 'u32[]', space=smem, size = 0x4, offset = 0x4, fixed_abs, tag = 'smem constant byte address 0x4 - core index']
  #allocation1 [shape = 'u32[144,128]{1,0:T(1,128)}', space=vmem, size = 0x12000, scoped, tag = 'internal scratch']
  %s0 = inlined_call_operand.hbm [shape: f32[18], index: 0, kind: input, shape index: {}]
  %s1 = inlined_call_operand.hbm [shape: f32[2,3,32,256], index: 1, kind: input, shape index: {}]
  %s2 = inlined_call_operand.hbm [shape: f32[2,32,256], index: 2, kind: output, shape index: {}]
  %s3 = sld [smem:[#allocation0]]
  $region49: #{tpu_custom_call.1} parent=0
    _
  %s5 = ssub.s32 1, %s3
  %s6 = scalar_select 0, %s5, %s3
  $region1: #{tpu_custom_call.1} parent=0
    #allocation2 [shape = 'u8[512]{0}', space=smem, size = 0x200, scoped, tag = 'input window, operand 0, single buffered']
    #allocation3 [shape = 's32[2]{0}', space=sflag, size = 0x8, scoped, tag = 'scoped memory for tpu_custom_call.1']
    #allocation4 [shape = 's32[2]{0}', space=sflag, size = 0x8, scoped, tag = 'scoped memory for tpu_custom_call.1']
    #allocation5 [shape = 's32[2]{0}', space=sflag, size = 0x8, scoped, tag = 'scoped memory for tpu_custom_call.1']
    #allocation6 [shape = 'u8[196608]{0}', space=vmem, size = 0x30000, scoped, tag = 'input window, operand 1']
    #allocation7 [shape = 'u8[65536]{0}', space=vmem, size = 0x10000, scoped, tag = 'output window, operand 0']
    %7 = vsyncpa [#allocation5], 0
    %8 = vsyncpa [#allocation3], 0
    %s9 = scalar_lea.sflag [#allocation3], 1
    %10 = vsyncpa %s9, 0
    %11 = vsyncpa [#allocation4], 0
    %s12 = scalar_lea.sflag [#allocation4], 1
    %13 = vsyncpa %s12, 0
    loop: start=0, step=1, limit=4
    $region2: #{tpu_custom_call.1} parent=1 // loop_pre_header
      _
    $region3: #{tpu_custom_call.1} parent=1 // loop_header
      %s15 = sphi 0, %s19
      %p16 = scmp.ge.s32.totalorder %s15, 4
      %s23 = sphi 0, %s23
      %s25 = sphi 0, %s23
      %s26 = sphi 0, %s25
      %s40 = sphi 0, %s26
      %s46 = sphi 0, %s48
      %s49 = sphi 0, %s46
      %s50 = sphi 0, %s49
      %s66 = sphi 0, %s50
      %s72 = sphi 0, %s74
      %s75 = sphi 0, %s72
      %s76 = sphi 0, %s75
      %s92 = sphi 0, %s76
    $region4: #{tpu_custom_call.1} parent=1 // loop_header_branch
      %18 = sbr.rel (%p16) target = $region8
    $region5: #{tpu_custom_call.1} parent=1 // loop_body
      %s20 = ssub.s32 %s15, 1
      %s21 = ssub.s32 %s15, 2
      %s22 = sadd.s32 %s15, 1
      %s24 = sadd.s32 %s23, 1
      %p27 = scmp.eq.s32.totalorder %s15, 1
      %p28 = scmp.ne.s32.totalorder %s23, %s25
      %p29 = scmp.eq.s32.totalorder %s15, 0
      %p30 = por %p28, %p29
      %p31 = scmp.ne.s32.totalorder %s23, %s25
      %p32 = scmp.eq.s32.totalorder %s20, 1
      %p33 = por %p31, %p32
      %p34 = scmp.ne.s32.totalorder %s25, %s26
      %p35 = scmp.eq.s32.totalorder %s20, 0
      %p36 = por %p34, %p35
      %p37 = scmp.ne.s32.totalorder %s25, %s26
      %p38 = scmp.eq.s32.totalorder %s21, 1
      %p39 = por %p37, %p38
      %p41 = scmp.ne.s32.totalorder %s26, %s40
      %p42 = scmp.eq.s32.totalorder %s21, 0
      %p43 = por %p41, %p42
      %s44 = ssub.s32 %s15, %s22
      %p45 = scmp.eq.s32.totalorder %s44, 0
      %s47 = sadd.s32 %s46, 1
      %s48 = scalar_select %p45, %s46, %s47
      %p51 = pneg %p45
      %p52 = scmp.eq.s32.totalorder %s15, 1
      %p53 = por %p51, %p52
      %p54 = scmp.ne.s32.totalorder %s46, %s49
      %p55 = scmp.eq.s32.totalorder %s15, 0
      %p56 = por %p54, %p55
      %p57 = scmp.ne.s32.totalorder %s46, %s49
      %p58 = scmp.eq.s32.totalorder %s20, 1
      %p59 = por %p57, %p58
      %p60 = scmp.ne.s32.totalorder %s49, %s50
      %p61 = scmp.eq.s32.totalorder %s20, 0
      %p62 = por %p60, %p61
      %p63 = scmp.ne.s32.totalorder %s49, %s50
      %p64 = scmp.eq.s32.totalorder %s21, 1
      %p65 = por %p63, %p64
      %p67 = scmp.ne.s32.totalorder %s50, %s66
      %p68 = scmp.eq.s32.totalorder %s21, 0
      %p69 = por %p67, %p68
      %s70 = ssub.s32 %s15, %s22
      %p71 = scmp.eq.s32.totalorder %s70, 0
      %s73 = sadd.s32 %s72, 1
      %s74 = scalar_select %p71, %s72, %s73
      %p77 = pneg %p71
      %p78 = scmp.eq.s32.totalorder %s15, 1
      %p79 = por %p77, %p78
      %p80 = scmp.ne.s32.totalorder %s72, %s75
      %p81 = scmp.eq.s32.totalorder %s15, 0
      %p82 = por %p80, %p81
      %p83 = scmp.ne.s32.totalorder %s72, %s75
      %p84 = scmp.eq.s32.totalorder %s20, 1
      %p85 = por %p83, %p84
      %p86 = scmp.ne.s32.totalorder %s75, %s76
      %p87 = scmp.eq.s32.totalorder %s20, 0
      %p88 = por %p86, %p87
      %p89 = scmp.ne.s32.totalorder %s75, %s76
      %p90 = scmp.eq.s32.totalorder %s21, 1
      %p91 = por %p89, %p90
      %p93 = scmp.ne.s32.totalorder %s76, %s92
      %p94 = scmp.eq.s32.totalorder %s21, 0
      %p95 = por %p93, %p94
      %p96 = scmp.le.s32.totalorder 1, %s15
      %p97 = scmp.lt.s32.totalorder %s15, 3
      %p98 = pnand %p96, %p97
      %p99 = pneg %p98
      // Predicated region
      $region9: #{tpu_custom_call.1} parent=5 // pred_check
        _
      $region10: #{tpu_custom_call.1} parent=5 // pred_check_branch
        %101 = sbr.rel (%p98) target = $region12
      $region11: #{tpu_custom_call.1} parent=5 // pred_region
        %s102 = ssub.s32 %s15, 1
        // Predicated region
        $region13: #{tpu_custom_call.1} parent=11 // pred_check
          %p103 = pneg %p36
        $region14: #{tpu_custom_call.1} parent=11 // pred_check_branch
          %105 = sbr.rel (%p103) target = $region16
        $region15: #{tpu_custom_call.1} parent=11 // pred_region
          %s107 = ssub.s32 16, 16
          %108 = vsyncadd [#allocation5], %s107
          %111 = dma.hbm_to_smem %s0, 16, [#allocation2], [#allocation5]
        $region16: #{tpu_custom_call.1} parent=11 // pred_fallthru
          _
      $region12: #{tpu_custom_call.1} parent=5 // pred_fallthru
        _
      %p112 = scmp.lt.s32.totalorder %s15, 2
      // Predicated region
      $region17: #{tpu_custom_call.1} parent=5 // pred_check
        %p113 = pneg %p112
      $region18: #{tpu_custom_call.1} parent=5 // pred_check_branch
        %115 = sbr.rel (%p113) target = $region20
      $region19: #{tpu_custom_call.1} parent=5 // pred_region
        // Predicated region
        $region21: #{tpu_custom_call.1} parent=19 // pred_check
          %p116 = pneg %p56
        $region22: #{tpu_custom_call.1} parent=19 // pred_check_branch
          %118 = sbr.rel (%p116) target = $region24
        $region23: #{tpu_custom_call.1} parent=19 // pred_region
          %s119 = sand.u32 %s46, 1
          %s120 = scalar_lea.sflag [#allocation3], %s119
          %s121 = sand.u32 %s46, 1
          %s122 = smul.addr %s121, 192
          %s123 = scalar_lea.vmem [#allocation6], %s122
          %s125 = ssub.s32 3072, 3072
          %126 = vsyncadd %s120, %s125
          %s127 = smul.addr %s15, 24
          %s128 = smul.addr %s127, 128
          %s129 = scalar_lea.hbm %s1, %s128
          %s130 = sshll.u32 %s123, 4
          %s131 = int_to_ptr.vmem [resolvable:$true] %s130
          %136 = dma.hbm_to_vmem [thread:$0]  %s129, 3072, %s131, %s120, 256, 256, 16
        $region24: #{tpu_custom_call.1} parent=19 // pred_fallthru
          _
      $region20: #{tpu_custom_call.1} parent=5 // pred_fallthru
        _
      %p137 = scmp.le.s32.totalorder 1, %s15
      %p138 = scmp.lt.s32.totalorder %s15, 3
      %p139 = pnand %p137, %p138
      %p140 = pneg %p139
      // Predicated region
      $region25: #{tpu_custom_call.1} parent=5 // pred_check
        _
      $region26: #{tpu_custom_call.1} parent=5 // pred_check_branch
        %142 = sbr.rel (%p139) target = $region28
      $region27: #{tpu_custom_call.1} parent=5 // pred_region
        %s143 = ssub.s32 %s15, 1
        // Predicated region
        $region29: #{tpu_custom_call.1} parent=27 // pred_check
          %p144 = pneg %p36
        $region30: #{tpu_custom_call.1} parent=27 // pred_check_branch
          %146 = sbr.rel (%p144) target = $region32
        $region31: #{tpu_custom_call.1} parent=27 // pred_region
          %147 = dma.done [#allocation5], 16
        $region32: #{tpu_custom_call.1} parent=27 // pred_fallthru
          _
        %s148 = sand.u32 %s49, 1
        %s149 = scalar_lea.sflag [#allocation3], %s148
        %s150 = sand.u32 %s49, 1
        %s151 = smul.addr %s150, 192
        %s152 = scalar_lea.vmem [#allocation6], %s151
        // Predicated region
        $region33: #{tpu_custom_call.1} parent=27 // pred_check
          %p153 = pneg %p62
        $region34: #{tpu_custom_call.1} parent=27 // pred_check_branch
          %155 = sbr.rel (%p153) target = $region36
        $region35: #{tpu_custom_call.1} parent=27 // pred_region
          %156 = dma.done %s149, 3072
        $region36: #{tpu_custom_call.1} parent=27 // pred_fallthru
          _
        %157 = sfence
        %p158 = pneg %p36
        %p159 = pneg %p33
        %s160 = sand.u32 %s49, 1
        %s161 = scalar_lea.sflag [#allocation3], %s160
        %s162 = sand.u32 %s49, 1
        %s163 = smul.addr %s162, 192
        %s164 = scalar_lea.vmem [#allocation6], %s163
        %p165 = pneg %p62
        %p166 = pneg %p59
        %p167 = pneg %p88
        %p168 = pneg %p85
        %s169 = sand.u32 %s75, 1
        %s170 = scalar_lea.sflag [#allocation4], %s169
        %s171 = sand.u32 %s75, 1
        %s172 = smul.addr %s171, 64
        %s173 = scalar_lea.vmem [#allocation7], %s172
        %v174 = vld [vmem:[%s152] sm:$0xff]
        %v175 = vld [vmem:[%s152 + $0x8] sm:$0xff]
        %v176 = vld [vmem:[%s152 + $0x10] sm:$0xff]
        %v177 = vld [vmem:[%s152 + $0x18] sm:$0xff]
        %v178 = vld [vmem:[%s152 + $0x20] sm:$0xff]
        %v179 = vld [vmem:[%s152 + $0x28] sm:$0xff]
        %v180 = vld [vmem:[%s152 + $0x30] sm:$0xff]
        %v181 = vld [vmem:[%s152 + $0x38] sm:$0xff]
        %v182 = vadd.f32 %v174, %v176
        %v183 = vadd.f32 %v182, %v178
        %v184 = vadd.f32 %v183, %v180
        %v185 = vrot.slane %v184, 4
        %v186 = vadd.f32 %v184, %v185
        %v187 = vrot.slane %v186, 2
        %v188 = vadd.f32 %v186, %v187
        %v189 = vrot.slane %v188, 1
        %v190 = vadd.f32 %v188, %v189
        %v191 = vadd.f32 %v175, %v177
        %v192 = vadd.f32 %v191, %v179
        %v193 = vadd.f32 %v192, %v181
        %v194 = vrot.slane %v193, 4
        %v195 = vadd.f32 %v193, %v194
        %v196 = vrot.slane %v195, 2
        %v197 = vadd.f32 %v195, %v196
        %v198 = vrot.slane %v197, 1
        %v199 = vadd.f32 %v197, %v198
        %v200 = vrcp.pop 32.0
        %v201 = vmul.f32 %v190, %v200
        %v202 = vmul.f32 %v199, %v200
        %v203 = vmax.f32 %v174, %v178
        %v204 = vmax.f32 %v176, %v180
        %v205 = vmax.f32 %v203, %v204
        %v206 = vrot.slane %v205, 4
        %v207 = vmax.f32 %v205, %v206
        %v208 = vrot.slane %v207, 2
        %v209 = vmax.f32 %v207, %v208
        %v210 = vrot.slane %v209, 1
        %v211 = vmax.f32 %v209, %v210
        %v212 = vmax.f32 %v175, %v179
        %v213 = vmax.f32 %v177, %v181
        %v214 = vmax.f32 %v212, %v213
        %v215 = vrot.slane %v214, 4
        %v216 = vmax.f32 %v214, %v215
        %v217 = vrot.slane %v216, 2
        %v218 = vmax.f32 %v216, %v217
        %v219 = vrot.slane %v218, 1
        %v220 = vmax.f32 %v218, %v219
        %s221 = scalar_lea.vmem %s152, 64 [#allocation6]
        %v222 = vld [vmem:[%s221] sm:$0xff]
        %v223 = vld [vmem:[%s221 + $0x8] sm:$0xff]
        %v224 = vld [vmem:[%s221 + $0x10] sm:$0xff]
        %v225 = vld [vmem:[%s221 + $0x18] sm:$0xff]
        %v226 = vld [vmem:[%s221 + $0x20] sm:$0xff]
        %v227 = vld [vmem:[%s221 + $0x28] sm:$0xff]
        %v228 = vld [vmem:[%s221 + $0x30] sm:$0xff]
        %v229 = vld [vmem:[%s221 + $0x38] sm:$0xff]
        %v230 = vadd.f32 %v222, %v224
        %v231 = vadd.f32 %v230, %v226
        %v232 = vadd.f32 %v231, %v228
        %v233 = vrot.slane %v232, 4
        %v234 = vadd.f32 %v232, %v233
        %v235 = vrot.slane %v234, 2
        %v236 = vadd.f32 %v234, %v235
        %v237 = vrot.slane %v236, 1
        %v238 = vadd.f32 %v236, %v237
        %v239 = vadd.f32 %v223, %v225
        %v240 = vadd.f32 %v239, %v227
        %v241 = vadd.f32 %v240, %v229
        %v242 = vrot.slane %v241, 4
        %v243 = vadd.f32 %v241, %v242
        %v244 = vrot.slane %v243, 2
        %v245 = vadd.f32 %v243, %v244
        %v246 = vrot.slane %v245, 1
        %v247 = vadd.f32 %v245, %v246
        %v248 = vmul.f32 %v238, %v200
        %v249 = vmul.f32 %v247, %v200
        %v250 = vmax.f32 %v222, %v226
        %v251 = vmax.f32 %v224, %v228
        %v252 = vmax.f32 %v250, %v251
        %v253 = vrot.slane %v252, 4
        %v254 = vmax.f32 %v252, %v253
        %v255 = vrot.slane %v254, 2
        %v256 = vmax.f32 %v254, %v255
        %v257 = vrot.slane %v256, 1
        %v258 = vmax.f32 %v256, %v257
        %v259 = vmax.f32 %v223, %v227
        %v260 = vmax.f32 %v225, %v229
        %v261 = vmax.f32 %v259, %v260
        %v262 = vrot.slane %v261, 4
        %v263 = vmax.f32 %v261, %v262
        %v264 = vrot.slane %v263, 2
        %v265 = vmax.f32 %v263, %v264
        %v266 = vrot.slane %v265, 1
        %v267 = vmax.f32 %v265, %v266
        %s268 = scalar_lea.vmem %s152, 128 [#allocation6]
        %v269 = vld [vmem:[%s268] sm:$0xff]
        %v270 = vld [vmem:[%s268 + $0x8] sm:$0xff]
        %v271 = vld [vmem:[%s268 + $0x10] sm:$0xff]
        %v272 = vld [vmem:[%s268 + $0x18] sm:$0xff]
        %v273 = vld [vmem:[%s268 + $0x20] sm:$0xff]
        %v274 = vld [vmem:[%s268 + $0x28] sm:$0xff]
        %v275 = vld [vmem:[%s268 + $0x30] sm:$0xff]
        %v276 = vld [vmem:[%s268 + $0x38] sm:$0xff]
        %v277 = vadd.f32 %v269, %v271
        %v278 = vadd.f32 %v277, %v273
        %v279 = vadd.f32 %v278, %v275
        %v280 = vrot.slane %v279, 4
        %v281 = vadd.f32 %v279, %v280
        %v282 = vrot.slane %v281, 2
        %v283 = vadd.f32 %v281, %v282
        %v284 = vrot.slane %v283, 1
        %v285 = vadd.f32 %v283, %v284
        %v286 = vadd.f32 %v270, %v272
        %v287 = vadd.f32 %v286, %v274
        %v288 = vadd.f32 %v287, %v276
        %v289 = vrot.slane %v288, 4
        %v290 = vadd.f32 %v288, %v289
        %v291 = vrot.slane %v290, 2
        %v292 = vadd.f32 %v290, %v291
        %v293 = vrot.slane %v292, 1
        %v294 = vadd.f32 %v292, %v293
        %v295 = vmul.f32 %v285, %v200
        %v296 = vmul.f32 %v294, %v200
        %v297 = vmax.f32 %v269, %v273
        %v298 = vmax.f32 %v271, %v275
        %v299 = vmax.f32 %v297, %v298
        %v300 = vrot.slane %v299, 4
        %v301 = vmax.f32 %v299, %v300
        %v302 = vrot.slane %v301, 2
        %v303 = vmax.f32 %v301, %v302
        %v304 = vrot.slane %v303, 1
        %v305 = vmax.f32 %v303, %v304
        %v306 = vmax.f32 %v270, %v274
        %v307 = vmax.f32 %v272, %v276
        %v308 = vmax.f32 %v306, %v307
        %v309 = vrot.slane %v308, 4
        %v310 = vmax.f32 %v308, %v309
        %v311 = vrot.slane %v310, 2
        %v312 = vmax.f32 %v310, %v311
        %v313 = vrot.slane %v312, 1
        %v314 = vmax.f32 %v312, %v313
        %s315 = sld [smem:[#allocation2]]
        %s316 = sld [smem:[#allocation2 + $0x9]]
        %317 = vrot.lane.b32.xlu0 %v201, 17
        %v318 = vpop.permute.xlu0 %317
        %319 = vrot.lane.b32.xlu0 %v202, 17
        %v320 = vpop.permute.xlu0 %319
        %v321 = vlaneseq
        %v322 = vand.u32 %v321, 127
        %vm323 = vcmp.lt.s32.totalorder %v322, 17
        %v324 = vsel %vm323, %v318, %v320
        %v325 = vsel %vm323, %v320, %v318
        %v326 = vstv %s315
        %v327 = vmul.f32 %v326, %v325
        %v328 = vmul.f32 %v326, %v324
        %v329 = vadd.f32 %v327, 0.0
        %v330 = vadd.f32 %v328, 0.0
        %331 = vrot.lane.b32.xlu0 %v211, 17
        %v332 = vpop.permute.xlu0 %331
        %333 = vrot.lane.b32.xlu0 %v220, 17
        %v334 = vpop.permute.xlu0 %333
        %v335 = vsel %vm323, %v332, %v334
        %v336 = vsel %vm323, %v334, %v332
        %v337 = vstv %s316
        %v338 = vmul.f32 %v337, %v336
        %v339 = vmul.f32 %v337, %v335
        %v340 = vadd.f32 %v329, %v338
        %v341 = vadd.f32 %v330, %v339
        %s342 = sld [smem:[#allocation2 + $0x1]]
        %s343 = sld [smem:[#allocation2 + $0xa]]
        %344 = vrot.lane.b32.xlu0 %v201, 16
        %v345 = vpop.permute.xlu0 %344
        %346 = vrot.lane.b32.xlu0 %v202, 16
        %v347 = vpop.permute.xlu0 %346
        %vm348 = vcmp.lt.s32.totalorder %v322, 16
        %v349 = vsel %vm348, %v345, %v347
        %v350 = vsel %vm348, %v347, %v345
        %v351 = vstv %s342
        %v352 = vmul.f32 %v351, %v350
        %v353 = vmul.f32 %v351, %v349
        %v354 = vadd.f32 %v340, %v352
        %v355 = vadd.f32 %v341, %v353
        %356 = vrot.lane.b32.xlu0 %v211, 16
        %v357 = vpop.permute.xlu0 %356
        %358 = vrot.lane.b32.xlu0 %v220, 16
        %v359 = vpop.permute.xlu0 %358
        %v360 = vsel %vm348, %v357, %v359
        %v361 = vsel %vm348, %v359, %v357
        %v362 = vstv %s343
        %v363 = vmul.f32 %v362, %v361
        %v364 = vmul.f32 %v362, %v360
        %v365 = vadd.f32 %v354, %v363
        %v366 = vadd.f32 %v355, %v364
        %s367 = sld [smem:[#allocation2 + $0x2]]
        %s368 = sld [smem:[#allocation2 + $0xb]]
        %369 = vrot.lane.b32.xlu0 %v201, 15
        %v370 = vpop.permute.xlu0 %369
        %371 = vrot.lane.b32.xlu0 %v202, 15
        %v372 = vpop.permute.xlu0 %371
        %vm373 = vcmp.lt.s32.totalorder %v322, 15
        %v374 = vsel %vm373, %v370, %v372
        %v375 = vsel %vm373, %v372, %v370
        %v376 = vstv %s367
        %v377 = vmul.f32 %v376, %v375
        %v378 = vmul.f32 %v376, %v374
        %v379 = vadd.f32 %v365, %v377
        %v380 = vadd.f32 %v366, %v378
        %381 = vrot.lane.b32.xlu0 %v211, 15
        %v382 = vpop.permute.xlu0 %381
        %383 = vrot.lane.b32.xlu0 %v220, 15
        %v384 = vpop.permute.xlu0 %383
        %v385 = vsel %vm373, %v382, %v384
        %v386 = vsel %vm373, %v384, %v382
        %v387 = vstv %s368
        %v388 = vmul.f32 %v387, %v386
        %v389 = vmul.f32 %v387, %v385
        %v390 = vadd.f32 %v379, %v388
        %v391 = vadd.f32 %v380, %v389
        %s392 = sld [smem:[#allocation2 + $0x3]]
        %s393 = sld [smem:[#allocation2 + $0xc]]
        %394 = vrot.lane.b32.xlu0 %v201, 1
        %v395 = vpop.permute.xlu0 %394
        %396 = vrot.lane.b32.xlu0 %v202, 1
        %v397 = vpop.permute.xlu0 %396
        %vm398 = vcmp.lt.s32.totalorder %v322, 1
        %v399 = vsel %vm398, %v395, %v397
        %v400 = vsel %vm398, %v397, %v395
        %v401 = vstv %s392
        %v402 = vmul.f32 %v401, %v400
        %v403 = vmul.f32 %v401, %v399
        %v404 = vadd.f32 %v390, %v402
        %v405 = vadd.f32 %v391, %v403
        %406 = vrot.lane.b32.xlu0 %v211, 1
        %v407 = vpop.permute.xlu0 %406
        %408 = vrot.lane.b32.xlu0 %v220, 1
        %v409 = vpop.permute.xlu0 %408
        %v410 = vsel %vm398, %v407, %v409
        %v411 = vsel %vm398, %v409, %v407
        %v412 = vstv %s393
        %v413 = vmul.f32 %v412, %v411
        %v414 = vmul.f32 %v412, %v410
        %v415 = vadd.f32 %v404, %v413
        %v416 = vadd.f32 %v405, %v414
        %s417 = sld [smem:[#allocation2 + $0x4]]
        %s418 = sld [smem:[#allocation2 + $0xd]]
        %v419 = vstv %s417
        %v420 = vmul.f32 %v419, %v201
        %v421 = vmul.f32 %v419, %v202
        %v422 = vadd.f32 %v415, %v420
        %v423 = vadd.f32 %v416, %v421
        %v424 = vstv %s418
        %v425 = vmul.f32 %v424, %v211
        %v426 = vmul.f32 %v424, %v220
        %v427 = vadd.f32 %v422, %v425
        %v428 = vadd.f32 %v423, %v426
        %s429 = sld [smem:[#allocation2 + $0x5]]
        %s430 = sld [smem:[#allocation2 + $0xe]]
        %431 = vrot.lane.b32.xlu0 %v201, 127
        %v432 = vpop.permute.xlu0 %431
        %433 = vrot.lane.b32.xlu0 %v202, 127
        %v434 = vpop.permute.xlu0 %433
        %vm435 = vcmp.lt.s32.totalorder %v322, 127
        %v436 = vsel %vm435, %v432, %v434
        %v437 = vsel %vm435, %v434, %v432
        %v438 = vstv %s429
        %v439 = vmul.f32 %v438, %v436
        %v440 = vmul.f32 %v438, %v437
        %v441 = vadd.f32 %v427, %v439
        %v442 = vadd.f32 %v428, %v440
        %443 = vrot.lane.b32.xlu0 %v211, 127
        %v444 = vpop.permute.xlu0 %443
        %445 = vrot.lane.b32.xlu0 %v220, 127
        %v446 = vpop.permute.xlu0 %445
        %v447 = vsel %vm435, %v444, %v446
        %v448 = vsel %vm435, %v446, %v444
        %v449 = vstv %s430
        %v450 = vmul.f32 %v449, %v447
        %v451 = vmul.f32 %v449, %v448
        %v452 = vadd.f32 %v441, %v450
        %v453 = vadd.f32 %v442, %v451
        %s454 = sld [smem:[#allocation2 + $0x6]]
        %s455 = sld [smem:[#allocation2 + $0xf]]
        %456 = vrot.lane.b32.xlu0 %v201, 113
        %v457 = vpop.permute.xlu0 %456
        %458 = vrot.lane.b32.xlu0 %v202, 113
        %v459 = vpop.permute.xlu0 %458
        %vm460 = vcmp.lt.s32.totalorder %v322, 113
        %v461 = vsel %vm460, %v457, %v459
        %v462 = vsel %vm460, %v459, %v457
        %v463 = vstv %s454
        %v464 = vmul.f32 %v463, %v461
        %v465 = vmul.f32 %v463, %v462
        %v466 = vadd.f32 %v452, %v464
        %v467 = vadd.f32 %v453, %v465
        %468 = vrot.lane.b32.xlu0 %v211, 113
        %v469 = vpop.permute.xlu0 %468
        %470 = vrot.lane.b32.xlu0 %v220, 113
        %v471 = vpop.permute.xlu0 %470
        %v472 = vsel %vm460, %v469, %v471
        %v473 = vsel %vm460, %v471, %v469
        %v474 = vstv %s455
        %v475 = vmul.f32 %v474, %v472
        %v476 = vmul.f32 %v474, %v473
        %v477 = vadd.f32 %v466, %v475
        %v478 = vadd.f32 %v467, %v476
        %s479 = sld [smem:[#allocation2 + $0x7]]
        %s480 = sld [smem:[#allocation2 + $0x10]]
        %481 = vrot.lane.b32.xlu0 %v201, 112
        %v482 = vpop.permute.xlu0 %481
        %483 = vrot.lane.b32.xlu0 %v202, 112
        %v484 = vpop.permute.xlu0 %483
        %vm485 = vcmp.lt.s32.totalorder %v322, 112
        %v486 = vsel %vm485, %v482, %v484
        %v487 = vsel %vm485, %v484, %v482
        %v488 = vstv %s479
        %v489 = vmul.f32 %v488, %v486
        %v490 = vmul.f32 %v488, %v487
        %v491 = vadd.f32 %v477, %v489
        %v492 = vadd.f32 %v478, %v490
        %493 = vrot.lane.b32.xlu0 %v211, 112
        %v494 = vpop.permute.xlu0 %493
        %495 = vrot.lane.b32.xlu0 %v220, 112
        %v496 = vpop.permute.xlu0 %495
        %v497 = vsel %vm485, %v494, %v496
        %v498 = vsel %vm485, %v496, %v494
        %v499 = vstv %s480
        %v500 = vmul.f32 %v499, %v497
        %v501 = vmul.f32 %v499, %v498
        %v502 = vadd.f32 %v491, %v500
        %v503 = vadd.f32 %v492, %v501
        %s504 = sld [smem:[#allocation2 + $0x8]]
        %s505 = sld [smem:[#allocation2 + $0x11]]
        %506 = vrot.lane.b32.xlu0 %v201, 111
        %v507 = vpop.permute.xlu0 %506
        %508 = vrot.lane.b32.xlu0 %v202, 111
        %v509 = vpop.permute.xlu0 %508
        %vm510 = vcmp.lt.s32.totalorder %v322, 111
        %v511 = vsel %vm510, %v507, %v509
        %v512 = vsel %vm510, %v509, %v507
        %v513 = vstv %s504
        %v514 = vmul.f32 %v513, %v511
        %v515 = vmul.f32 %v513, %v512
        %v516 = vadd.f32 %v502, %v514
        %v517 = vadd.f32 %v503, %v515
        %518 = vrot.lane.b32.xlu0 %v211, 111
        %v519 = vpop.permute.xlu0 %518
        %520 = vrot.lane.b32.xlu0 %v220, 111
        %v521 = vpop.permute.xlu0 %520
        %v522 = vsel %vm510, %v519, %v521
        %v523 = vsel %vm510, %v521, %v519
        %v524 = vstv %s505
        %v525 = vmul.f32 %v524, %v522
        %v526 = vmul.f32 %v524, %v523
        %v527 = vadd.f32 %v516, %v525
        %v528 = vadd.f32 %v517, %v526
        %529 = vrot.lane.b32.xlu0 %v248, 17
        %v530 = vpop.permute.xlu0 %529
        %531 = vrot.lane.b32.xlu0 %v249, 17
        %v532 = vpop.permute.xlu0 %531
        %v533 = vsel %vm323, %v530, %v532
        %v534 = vsel %vm323, %v532, %v530
        %v535 = vmul.f32 %v326, %v534
        %v536 = vmul.f32 %v326, %v533
        %v537 = vadd.f32 %v535, 0.0
        %v538 = vadd.f32 %v536, 0.0
        %539 = vrot.lane.b32.xlu0 %v258, 17
        %v540 = vpop.permute.xlu0 %539
        %541 = vrot.lane.b32.xlu0 %v267, 17
        %v542 = vpop.permute.xlu0 %541
        %v543 = vsel %vm323, %v540, %v542
        %v544 = vsel %vm323, %v542, %v540
        %v545 = vmul.f32 %v337, %v544
        %v546 = vmul.f32 %v337, %v543
        %v547 = vadd.f32 %v537, %v545
        %v548 = vadd.f32 %v538, %v546
        %549 = vrot.lane.b32.xlu0 %v248, 16
        %v550 = vpop.permute.xlu0 %549
        %551 = vrot.lane.b32.xlu0 %v249, 16
        %v552 = vpop.permute.xlu0 %551
        %v553 = vsel %vm348, %v550, %v552
        %v554 = vsel %vm348, %v552, %v550
        %v555 = vmul.f32 %v351, %v554
        %v556 = vmul.f32 %v351, %v553
        %v557 = vadd.f32 %v547, %v555
        %v558 = vadd.f32 %v548, %v556
        %559 = vrot.lane.b32.xlu0 %v258, 16
        %v560 = vpop.permute.xlu0 %559
        %561 = vrot.lane.b32.xlu0 %v267, 16
        %v562 = vpop.permute.xlu0 %561
        %v563 = vsel %vm348, %v560, %v562
        %v564 = vsel %vm348, %v562, %v560
        %v565 = vmul.f32 %v362, %v564
        %v566 = vmul.f32 %v362, %v563
        %v567 = vadd.f32 %v557, %v565
        %v568 = vadd.f32 %v558, %v566
        %569 = vrot.lane.b32.xlu0 %v248, 15
        %v570 = vpop.permute.xlu0 %569
        %571 = vrot.lane.b32.xlu0 %v249, 15
        %v572 = vpop.permute.xlu0 %571
        %v573 = vsel %vm373, %v570, %v572
        %v574 = vsel %vm373, %v572, %v570
        %v575 = vmul.f32 %v376, %v574
        %v576 = vmul.f32 %v376, %v573
        %v577 = vadd.f32 %v567, %v575
        %v578 = vadd.f32 %v568, %v576
        %579 = vrot.lane.b32.xlu0 %v258, 15
        %v580 = vpop.permute.xlu0 %579
        %581 = vrot.lane.b32.xlu0 %v267, 15
        %v582 = vpop.permute.xlu0 %581
        %v583 = vsel %vm373, %v580, %v582
        %v584 = vsel %vm373, %v582, %v580
        %v585 = vmul.f32 %v387, %v584
        %v586 = vmul.f32 %v387, %v583
        %v587 = vadd.f32 %v577, %v585
        %v588 = vadd.f32 %v578, %v586
        %589 = vrot.lane.b32.xlu0 %v248, 1
        %v590 = vpop.permute.xlu0 %589
        %591 = vrot.lane.b32.xlu0 %v249, 1
        %v592 = vpop.permute.xlu0 %591
        %v593 = vsel %vm398, %v590, %v592
        %v594 = vsel %vm398, %v592, %v590
        %v595 = vmul.f32 %v401, %v594
        %v596 = vmul.f32 %v401, %v593
        %v597 = vadd.f32 %v587, %v595
        %v598 = vadd.f32 %v588, %v596
        %599 = vrot.lane.b32.xlu0 %v258, 1
        %v600 = vpop.permute.xlu0 %599
        %601 = vrot.lane.b32.xlu0 %v267, 1
        %v602 = vpop.permute.xlu0 %601
        %v603 = vsel %vm398, %v600, %v602
        %v604 = vsel %vm398, %v602, %v600
        %v605 = vmul.f32 %v412, %v604
        %v606 = vmul.f32 %v412, %v603
        %v607 = vadd.f32 %v597, %v605
        %v608 = vadd.f32 %v598, %v606
        %v609 = vmul.f32 %v419, %v248
        %v610 = vmul.f32 %v419, %v249
        %v611 = vadd.f32 %v607, %v609
        %v612 = vadd.f32 %v608, %v610
        %v613 = vmul.f32 %v424, %v258
        %v614 = vmul.f32 %v424, %v267
        %v615 = vadd.f32 %v611, %v613
        %v616 = vadd.f32 %v612, %v614
        %617 = vrot.lane.b32.xlu0 %v248, 127
        %v618 = vpop.permute.xlu0 %617
        %619 = vrot.lane.b32.xlu0 %v249, 127
        %v620 = vpop.permute.xlu0 %619
        %v621 = vsel %vm435, %v618, %v620
        %v622 = vsel %vm435, %v620, %v618
        %v623 = vmul.f32 %v438, %v621
        %v624 = vmul.f32 %v438, %v622
        %v625 = vadd.f32 %v615, %v623
        %v626 = vadd.f32 %v616, %v624
        %627 = vrot.lane.b32.xlu0 %v258, 127
        %v628 = vpop.permute.xlu0 %627
        %629 = vrot.lane.b32.xlu0 %v267, 127
        %v630 = vpop.permute.xlu0 %629
        %v631 = vsel %vm435, %v628, %v630
        %v632 = vsel %vm435, %v630, %v628
        %v633 = vmul.f32 %v449, %v631
        %v634 = vmul.f32 %v449, %v632
        %v635 = vadd.f32 %v625, %v633
        %v636 = vadd.f32 %v626, %v634
        %637 = vrot.lane.b32.xlu0 %v248, 113
        %v638 = vpop.permute.xlu0 %637
        %639 = vrot.lane.b32.xlu0 %v249, 113
        %v640 = vpop.permute.xlu0 %639
        %v641 = vsel %vm460, %v638, %v640
        %v642 = vsel %vm460, %v640, %v638
        %v643 = vmul.f32 %v463, %v641
        %v644 = vmul.f32 %v463, %v642
        %v645 = vadd.f32 %v635, %v643
        %v646 = vadd.f32 %v636, %v644
        %647 = vrot.lane.b32.xlu0 %v258, 113
        %v648 = vpop.permute.xlu0 %647
        %649 = vrot.lane.b32.xlu0 %v267, 113
        %v650 = vpop.permute.xlu0 %649
        %v651 = vsel %vm460, %v648, %v650
        %v652 = vsel %vm460, %v650, %v648
        %v653 = vmul.f32 %v474, %v651
        %v654 = vmul.f32 %v474, %v652
        %v655 = vadd.f32 %v645, %v653
        %v656 = vadd.f32 %v646, %v654
        %657 = vrot.lane.b32.xlu0 %v248, 112
        %v658 = vpop.permute.xlu0 %657
        %659 = vrot.lane.b32.xlu0 %v249, 112
        %v660 = vpop.permute.xlu0 %659
        %v661 = vsel %vm485, %v658, %v660
        %v662 = vsel %vm485, %v660, %v658
        %v663 = vmul.f32 %v488, %v661
        %v664 = vmul.f32 %v488, %v662
        %v665 = vadd.f32 %v655, %v663
        %v666 = vadd.f32 %v656, %v664
        %667 = vrot.lane.b32.xlu0 %v258, 112
        %v668 = vpop.permute.xlu0 %667
        %669 = vrot.lane.b32.xlu0 %v267, 112
        %v670 = vpop.permute.xlu0 %669
        %v671 = vsel %vm485, %v668, %v670
        %v672 = vsel %vm485, %v670, %v668
        %v673 = vmul.f32 %v499, %v671
        %v674 = vmul.f32 %v499, %v672
        %v675 = vadd.f32 %v665, %v673
        %v676 = vadd.f32 %v666, %v674
        %677 = vrot.lane.b32.xlu0 %v248, 111
        %v678 = vpop.permute.xlu0 %677
        %679 = vrot.lane.b32.xlu0 %v249, 111
        %v680 = vpop.permute.xlu0 %679
        %v681 = vsel %vm510, %v678, %v680
        %v682 = vsel %vm510, %v680, %v678
        %v683 = vmul.f32 %v513, %v681
        %v684 = vmul.f32 %v513, %v682
        %v685 = vadd.f32 %v675, %v683
        %v686 = vadd.f32 %v676, %v684
        %687 = vrot.lane.b32.xlu0 %v258, 111
        %v688 = vpop.permute.xlu0 %687
        %689 = vrot.lane.b32.xlu0 %v267, 111
        %v690 = vpop.permute.xlu0 %689
        %v691 = vsel %vm510, %v688, %v690
        %v692 = vsel %vm510, %v690, %v688
        %v693 = vmul.f32 %v524, %v691
        %v694 = vmul.f32 %v524, %v692
        %v695 = vadd.f32 %v685, %v693
        %v696 = vadd.f32 %v686, %v694
        %697 = vrot.lane.b32.xlu0 %v295, 17
        %v698 = vpop.permute.xlu0 %697
        %699 = vrot.lane.b32.xlu0 %v296, 17
        %v700 = vpop.permute.xlu0 %699
        %v701 = vsel %vm323, %v698, %v700
        %v702 = vsel %vm323, %v700, %v698
        %v703 = vmul.f32 %v326, %v702
        %v704 = vmul.f32 %v326, %v701
        %v705 = vadd.f32 %v703, 0.0
        %v706 = vadd.f32 %v704, 0.0
        %707 = vrot.lane.b32.xlu0 %v305, 17
        %v708 = vpop.permute.xlu0 %707
        %709 = vrot.lane.b32.xlu0 %v314, 17
        %v710 = vpop.permute.xlu0 %709
        %v711 = vsel %vm323, %v708, %v710
        %v712 = vsel %vm323, %v710, %v708
        %v713 = vmul.f32 %v337, %v712
        %v714 = vmul.f32 %v337, %v711
        %v715 = vadd.f32 %v705, %v713
        %v716 = vadd.f32 %v706, %v714
        %717 = vrot.lane.b32.xlu0 %v295, 16
        %v718 = vpop.permute.xlu0 %717
        %719 = vrot.lane.b32.xlu0 %v296, 16
        %v720 = vpop.permute.xlu0 %719
        %v721 = vsel %vm348, %v718, %v720
        %v722 = vsel %vm348, %v720, %v718
        %v723 = vmul.f32 %v351, %v722
        %v724 = vmul.f32 %v351, %v721
        %v725 = vadd.f32 %v715, %v723
        %v726 = vadd.f32 %v716, %v724
        %727 = vrot.lane.b32.xlu0 %v305, 16
        %v728 = vpop.permute.xlu0 %727
        %729 = vrot.lane.b32.xlu0 %v314, 16
        %v730 = vpop.permute.xlu0 %729
        %v731 = vsel %vm348, %v728, %v730
        %v732 = vsel %vm348, %v730, %v728
        %v733 = vmul.f32 %v362, %v732
        %v734 = vmul.f32 %v362, %v731
        %v735 = vadd.f32 %v725, %v733
        %v736 = vadd.f32 %v726, %v734
        %737 = vrot.lane.b32.xlu0 %v295, 15
        %v738 = vpop.permute.xlu0 %737
        %739 = vrot.lane.b32.xlu0 %v296, 15
        %v740 = vpop.permute.xlu0 %739
        %v741 = vsel %vm373, %v738, %v740
        %v742 = vsel %vm373, %v740, %v738
        %v743 = vmul.f32 %v376, %v742
        %v744 = vmul.f32 %v376, %v741
        %v745 = vadd.f32 %v735, %v743
        %v746 = vadd.f32 %v736, %v744
        %747 = vrot.lane.b32.xlu0 %v305, 15
        %v748 = vpop.permute.xlu0 %747
        %749 = vrot.lane.b32.xlu0 %v314, 15
        %v750 = vpop.permute.xlu0 %749
        %v751 = vsel %vm373, %v748, %v750
        %v752 = vsel %vm373, %v750, %v748
        %v753 = vmul.f32 %v387, %v752
        %v754 = vmul.f32 %v387, %v751
        %v755 = vadd.f32 %v745, %v753
        %v756 = vadd.f32 %v746, %v754
        %757 = vrot.lane.b32.xlu0 %v295, 1
        %v758 = vpop.permute.xlu0 %757
        %759 = vrot.lane.b32.xlu0 %v296, 1
        %v760 = vpop.permute.xlu0 %759
        %v761 = vsel %vm398, %v758, %v760
        %v762 = vsel %vm398, %v760, %v758
        %v763 = vmul.f32 %v401, %v762
        %v764 = vmul.f32 %v401, %v761
        %v765 = vadd.f32 %v755, %v763
        %v766 = vadd.f32 %v756, %v764
        %767 = vrot.lane.b32.xlu0 %v305, 1
        %v768 = vpop.permute.xlu0 %767
        %769 = vrot.lane.b32.xlu0 %v314, 1
        %v770 = vpop.permute.xlu0 %769
        %v771 = vsel %vm398, %v768, %v770
        %v772 = vsel %vm398, %v770, %v768
        %v773 = vmul.f32 %v412, %v772
        %v774 = vmul.f32 %v412, %v771
        %v775 = vadd.f32 %v765, %v773
        %v776 = vadd.f32 %v766, %v774
        %v777 = vmul.f32 %v419, %v295
        %v778 = vmul.f32 %v419, %v296
        %v779 = vadd.f32 %v775, %v777
        %v780 = vadd.f32 %v776, %v778
        %v781 = vmul.f32 %v424, %v305
        %v782 = vmul.f32 %v424, %v314
        %v783 = vadd.f32 %v779, %v781
        %v784 = vadd.f32 %v780, %v782
        %785 = vrot.lane.b32.xlu0 %v295, 127
        %v786 = vpop.permute.xlu0 %785
        %787 = vrot.lane.b32.xlu0 %v296, 127
        %v788 = vpop.permute.xlu0 %787
        %v789 = vsel %vm435, %v786, %v788
        %v790 = vsel %vm435, %v788, %v786
        %v791 = vmul.f32 %v438, %v789
        %v792 = vmul.f32 %v438, %v790
        %v793 = vadd.f32 %v783, %v791
        %v794 = vadd.f32 %v784, %v792
        %795 = vrot.lane.b32.xlu0 %v305, 127
        %v796 = vpop.permute.xlu0 %795
        %797 = vrot.lane.b32.xlu0 %v314, 127
        %v798 = vpop.permute.xlu0 %797
        %v799 = vsel %vm435, %v796, %v798
        %v800 = vsel %vm435, %v798, %v796
        %v801 = vmul.f32 %v449, %v799
        %v802 = vmul.f32 %v449, %v800
        %v803 = vadd.f32 %v793, %v801
        %v804 = vadd.f32 %v794, %v802
        %805 = vrot.lane.b32.xlu0 %v295, 113
        %v806 = vpop.permute.xlu0 %805
        %807 = vrot.lane.b32.xlu0 %v296, 113
        %v808 = vpop.permute.xlu0 %807
        %v809 = vsel %vm460, %v806, %v808
        %v810 = vsel %vm460, %v808, %v806
        %v811 = vmul.f32 %v463, %v809
        %v812 = vmul.f32 %v463, %v810
        %v813 = vadd.f32 %v803, %v811
        %v814 = vadd.f32 %v804, %v812
        %815 = vrot.lane.b32.xlu0 %v305, 113
        %v816 = vpop.permute.xlu0 %815
        %817 = vrot.lane.b32.xlu0 %v314, 113
        %v818 = vpop.permute.xlu0 %817
        %v819 = vsel %vm460, %v816, %v818
        %v820 = vsel %vm460, %v818, %v816
        %v821 = vmul.f32 %v474, %v819
        %v822 = vmul.f32 %v474, %v820
        %v823 = vadd.f32 %v813, %v821
        %v824 = vadd.f32 %v814, %v822
        %825 = vrot.lane.b32.xlu0 %v295, 112
        %v826 = vpop.permute.xlu0 %825
        %827 = vrot.lane.b32.xlu0 %v296, 112
        %v828 = vpop.permute.xlu0 %827
        %v829 = vsel %vm485, %v826, %v828
        %v830 = vsel %vm485, %v828, %v826
        %v831 = vmul.f32 %v488, %v829
        %v832 = vmul.f32 %v488, %v830
        %v833 = vadd.f32 %v823, %v831
        %v834 = vadd.f32 %v824, %v832
        %835 = vrot.lane.b32.xlu0 %v305, 112
        %v836 = vpop.permute.xlu0 %835
        %837 = vrot.lane.b32.xlu0 %v314, 112
        %v838 = vpop.permute.xlu0 %837
        %v839 = vsel %vm485, %v836, %v838
        %v840 = vsel %vm485, %v838, %v836
        %v841 = vmul.f32 %v499, %v839
        %v842 = vmul.f32 %v499, %v840
        %v843 = vadd.f32 %v833, %v841
        %v844 = vadd.f32 %v834, %v842
        %845 = vrot.lane.b32.xlu0 %v295, 111
        %v846 = vpop.permute.xlu0 %845
        %847 = vrot.lane.b32.xlu0 %v296, 111
        %v848 = vpop.permute.xlu0 %847
        %v849 = vsel %vm510, %v846, %v848
        %v850 = vsel %vm510, %v848, %v846
        %v851 = vmul.f32 %v513, %v849
        %v852 = vmul.f32 %v513, %v850
        %v853 = vadd.f32 %v843, %v851
        %v854 = vadd.f32 %v844, %v852
        %855 = vrot.lane.b32.xlu0 %v305, 111
        %v856 = vpop.permute.xlu0 %855
        %857 = vrot.lane.b32.xlu0 %v314, 111
        %v858 = vpop.permute.xlu0 %857
        %v859 = vsel %vm510, %v856, %v858
        %v860 = vsel %vm510, %v858, %v856
        %v861 = vmul.f32 %v524, %v859
        %v862 = vmul.f32 %v524, %v860
        %v863 = vadd.f32 %v853, %v861
        %v864 = vadd.f32 %v854, %v862
        %v865 = vmax.f32 %v527, %v695
        %v866 = vmax.f32 %v528, %v696
        %v867 = vmax.f32 %v865, %v863
        %v868 = vmax.f32 %v866, %v864
        %v869 = vsub.f32 %v527, %v867
        %v870 = vsub.f32 %v528, %v868
        %v871 = vmul.f32 %v869, 1.442695
        %v872 = vpow.pop %v871
        %v873 = vmul.f32 %v870, 1.442695
        %v874 = vpow.pop %v873
        %v875 = vsub.f32 %v695, %v867
        %v876 = vsub.f32 %v696, %v868
        %v877 = vmul.f32 %v875, 1.442695
        %v878 = vpow.pop %v877
        %v879 = vmul.f32 %v876, 1.442695
        %v880 = vpow.pop %v879
        %v881 = vsub.f32 %v863, %v867
        %v882 = vsub.f32 %v864, %v868
        %v883 = vmul.f32 %v881, 1.442695
        %v884 = vpow.pop %v883
        %v885 = vmul.f32 %v882, 1.442695
        %v886 = vpow.pop %v885
        %v887 = vadd.f32 %v872, %v878
        %v888 = vadd.f32 %v874, %v880
        %v889 = vadd.f32 %v887, %v884
        %v890 = vadd.f32 %v888, %v886
        %v891 = vrcp.pop %v889
        %v892 = vrcp.pop %v890
        %v893 = vmul.f32 %v889, %v891
        %v894 = vmul.f32 %v890, %v892
        %v895 = vsub.f32 2.0, %v893
        %v896 = vsub.f32 2.0, %v894
        %v897 = vmul.f32 %v891, %v895
        %v898 = vmul.f32 %v892, %v896
        %v899 = vmul.f32 %v872, %v897
        %v900 = vmul.f32 %v874, %v898
        %v901 = vmul.f32 %v878, %v897
        %v902 = vmul.f32 %v880, %v898
        %v903 = vmul.f32 %v884, %v897
        %v904 = vmul.f32 %v886, %v898
        %v905 = vlaneseq
        %v906 = vshrl.u32 %v905, 7
        %v907 = vsub.s32 0, %v906
        %v908 = vrot.slane %v899, %v907
        %v909 = vlaneseq
        %v910 = vshrl.u32 %v909, 7
        %v911 = vsub.s32 0, %v910
        %v912 = vrot.slane %v900, %v911
        %v913 = vmul.f32 %v174, %v908
        %v914 = vmul.f32 %v175, %v912
        %v915 = vmul.f32 %v176, %v908
        %v916 = vmul.f32 %v177, %v912
        %v917 = vmul.f32 %v178, %v908
        %v918 = vmul.f32 %v179, %v912
        %v919 = vmul.f32 %v180, %v908
        %v920 = vmul.f32 %v181, %v912
        %v921 = vlaneseq
        %v922 = vshrl.u32 %v921, 7
        %v923 = vsub.s32 0, %v922
        %v924 = vrot.slane %v901, %v923
        %v925 = vlaneseq
        %v926 = vshrl.u32 %v925, 7
        %v927 = vsub.s32 0, %v926
        %v928 = vrot.slane %v902, %v927
        %v929 = vmul.f32 %v222, %v924
        %v930 = vmul.f32 %v223, %v928
        %v931 = vmul.f32 %v224, %v924
        %v932 = vmul.f32 %v225, %v928
        %v933 = vmul.f32 %v226, %v924
        %v934 = vmul.f32 %v227, %v928
        %v935 = vmul.f32 %v228, %v924
        %v936 = vmul.f32 %v229, %v928
        %v937 = vadd.f32 %v913, %v929
        %v938 = vadd.f32 %v914, %v930
        %v939 = vadd.f32 %v915, %v931
        %v940 = vadd.f32 %v916, %v932
        %v941 = vadd.f32 %v917, %v933
        %v942 = vadd.f32 %v918, %v934
        %v943 = vadd.f32 %v919, %v935
        %v944 = vadd.f32 %v920, %v936
        %v945 = vlaneseq
        %v946 = vshrl.u32 %v945, 7
        %v947 = vsub.s32 0, %v946
        %v948 = vrot.slane %v903, %v947
        %v949 = vlaneseq
        %v950 = vshrl.u32 %v949, 7
        %v951 = vsub.s32 0, %v950
        %v952 = vrot.slane %v904, %v951
        %v953 = vmul.f32 %v269, %v948
        %v954 = vmul.f32 %v270, %v952
        %v955 = vmul.f32 %v271, %v948
        %v956 = vmul.f32 %v272, %v952
        %v957 = vmul.f32 %v273, %v948
        %v958 = vmul.f32 %v274, %v952
        %v959 = vmul.f32 %v275, %v948
        %v960 = vmul.f32 %v276, %v952
        %v961 = vadd.f32 %v937, %v953
        %v962 = vadd.f32 %v938, %v954
        %v963 = vadd.f32 %v939, %v955
        %v964 = vadd.f32 %v940, %v956
        %v965 = vadd.f32 %v941, %v957
        %v966 = vadd.f32 %v942, %v958
        %v967 = vadd.f32 %v943, %v959
        %v968 = vadd.f32 %v944, %v960
        %969 = vst [vmem:[%s173] sm:$0xff] %v961
        %970 = vst [vmem:[%s173 + $0x8] sm:$0xff] %v962
        %971 = vst [vmem:[%s173 + $0x10] sm:$0xff] %v963
        %972 = vst [vmem:[%s173 + $0x18] sm:$0xff] %v964
        %973 = vst [vmem:[%s173 + $0x20] sm:$0xff] %v965
        %974 = vst [vmem:[%s173 + $0x28] sm:$0xff] %v966
        %975 = vst [vmem:[%s173 + $0x30] sm:$0xff] %v967
        %976 = vst [vmem:[%s173 + $0x38] sm:$0xff] %v968
        %s977 = sand.u32 %s75, 1
        %s978 = scalar_lea.sflag [#allocation4], %s977
        %s979 = sand.u32 %s75, 1
        %s980 = smul.addr %s979, 64
        %s981 = scalar_lea.vmem [#allocation7], %s980
        // Predicated region
        $region37: #{tpu_custom_call.1} parent=27 // pred_check
          %p982 = pneg %p85
        $region38: #{tpu_custom_call.1} parent=27 // pred_check_branch
          %984 = sbr.rel (%p982) target = $region40
        $region39: #{tpu_custom_call.1} parent=27 // pred_region
          %s986 = ssub.s32 1024, 1024
          %987 = vsyncadd %s978, %s986
          %s988 = smul.addr %s20, 8
          %s989 = smul.addr %s988, 128
          %s990 = scalar_lea.hbm %s2, %s989
          %s991 = sshll.u32 %s981, 4
          %s992 = int_to_ptr.vmem [resolvable:$true] %s991
          %997 = dma.vmem_to_hbm [thread:$0]  %s992, 1024, %s990, %s978, 256, 256, 16
        $region40: #{tpu_custom_call.1} parent=27 // pred_fallthru
          _
      $region28: #{tpu_custom_call.1} parent=5 // pred_fallthru
        _
      %p998 = scmp.le.s32.totalorder 2, %s15
      // Predicated region
      $region41: #{tpu_custom_call.1} parent=5 // pred_check
        %p999 = pneg %p998
      $region42: #{tpu_custom_call.1} parent=5 // pred_check_branch
        %1001 = sbr.rel (%p999) target = $region44
      $region43: #{tpu_custom_call.1} parent=5 // pred_region
        %s1002 = ssub.s32 %s15, 2
        // Predicated region
        $region45: #{tpu_custom_call.1} parent=43 // pred_check
          %p1003 = pneg %p91
        $region46: #{tpu_custom_call.1} parent=43 // pred_check_branch
          %1005 = sbr.rel (%p1003) target = $region48
        $region47: #{tpu_custom_call.1} parent=43 // pred_region
          %s1006 = sand.u32 %s76, 1
          %s1007 = scalar_lea.sflag [#allocation4], %s1006
          %s1008 = sand.u32 %s76, 1
          %s1009 = smul.addr %s1008, 64
          %s1010 = scalar_lea.vmem [#allocation7], %s1009
          %1011 = dma.done %s1007, 1024
        $region48: #{tpu_custom_call.1} parent=43 // pred_fallthru
          _
      $region44: #{tpu_custom_call.1} parent=5 // pred_fallthru
        _
    $region6: #{tpu_custom_call.1} parent=1 // loop_footer
      %s19 = sadd.s32 1, %s15
    $region7: #{tpu_custom_call.1} parent=1 // loop_footer_branch
      %14 = sbr.rel target = $region3
    $region8: #{tpu_custom_call.1} parent=1 // loop_exit
      _
    %1012 = vsyncpa [#allocation3], 1
    %s1013 = scalar_lea.sflag [#allocation3], 1
    %1014 = vsyncpa %s1013, 1
    %1015 = vsyncpa [#allocation4], 1
    %s1016 = scalar_lea.sflag [#allocation4], 1
    %1017 = vsyncpa %s1016, 1
    %1018 = vsyncpa [#allocation5], 1
    %s1019 = scalar_lea.sflag [#allocation5], 1
    %1020 = vsyncpa %s1019, 1

</llo_original>
